<compile_context>
chip_gen: v7x
topology: tpu7x:2x2x1
jax: 0.10.0
libtpu: 0.0.40
codegen_flags: <defaults>
</compile_context>

<pallas_src>
import numpy as np
import jax
import jax.numpy as jnp
from jax import lax
from jax.experimental import pallas as pl
from jax.experimental.pallas import tpu as pltpu

N = 512  # number of elements per row (and padded output capacity)


def _nonzero_eq10_kernel(data_ref, idx_ref, count_ref):
    """data_ref: (1, 1, n) f32 VMEM; idx_ref: (1, 1, n) i32 VMEM; count_ref: (1,) i32 SMEM."""
    n = data_ref.shape[-1]
    data = data_ref[...].reshape(1, n)                     # (1, N) f32, lane-dense
    mask = (data == 10.0).astype(jnp.int32)                # (1, N) int32 0/1

    lane = lax.broadcasted_iota(jnp.int32, (1, n), 1)      # lane index (used as i and j)

    # ---- inclusive prefix sum of the mask along lanes: log2(N) roll (XLU) steps ----
    csum = mask
    shift = 1
    while shift < n:
        rolled = pltpu.roll(csum, shift=shift, axis=1)     # rolled[i] = csum[i - shift] (circular)
        csum = csum + jnp.where(lane >= shift, rolled, 0)  # mask out the wrap-around
        shift *= 2

    # number of matches: csum is non-decreasing, so max == last element
    count = jnp.max(csum)                                  # scalar int32
    count_ref[0] = count                                   # SMEM scalar output

    # ---- compaction (lane-dense): out[j] = #{ i : csum[i] <= j } -----------------
    # Loop over i in 8-row sublane groups so the (N, N) compare matrix is never
    # materialized; acc[s, j] accumulates the contribution of i = 8*g + s and a
    # single sublane reduce at the end produces the (1, N) result (j on lanes).
    csum_col = jnp.transpose(csum)                         # (N, 1): i on sublanes (one relayout)
    acc = jnp.zeros((8, n), jnp.int32)
    for g in range(n // 8):
        chunk = csum_col[g * 8:(g + 1) * 8, :]             # (8, 1) int32, static slice
        acc = acc + (chunk <= lane).astype(jnp.int32)      # fused (8, N) compare + add
    result = jnp.sum(acc, axis=0, keepdims=True)           # (1, N): p_j (== N for j >= count)

    out = jnp.where(lane < count, result, -1)              # pad invalid slots with -1
    idx_ref[...] = out.reshape(idx_ref.shape)


def nonzero_eq10(data):
    """data: (N,) float32 -> (padded flat indices (N,) int32, count int32 scalar).

    Equivalent to torch.nonzero(data == 10).squeeze() after the host-side slice
    idx_pad[:count].
    """
    n = data.shape[0]
    d3 = data.reshape(1, 1, n)
    idx, cnt = pl.pallas_call(
        _nonzero_eq10_kernel,
        in_specs=[pl.BlockSpec(memory_space=pltpu.MemorySpace.VMEM)],
        out_specs=(
            pl.BlockSpec(memory_space=pltpu.MemorySpace.VMEM),
            pl.BlockSpec(memory_space=pltpu.MemorySpace.SMEM),
        ),
        out_shape=(
            jax.ShapeDtypeStruct((1, 1, n), jnp.int32),
            jax.ShapeDtypeStruct((1,), jnp.int32),
        ),
    )(d3)
    return idx.reshape(n), cnt[0]


def nonzero_eq10_batched(data_b):
    """Batched variant: data_b (B, N) -> (idx (B, N) int32 padded with -1, count (B,) int32).

    One pallas_call for all B rows (amortizes launch/DMA overhead); the batch grid
    axis is 'parallel' so v7x's two TensorCores can split it.
    """
    B, n = data_b.shape
    d3 = data_b.reshape(B, 1, n)
    idx, cnt = pl.pallas_call(
        _nonzero_eq10_kernel,
        grid=(B,),
        in_specs=[pl.BlockSpec((1, 1, n), lambda b: (b, 0, 0))],
        out_specs=(
            pl.BlockSpec((1, 1, n), lambda b: (b, 0, 0)),
            pl.BlockSpec((1,), lambda b: (b,), memory_space=pltpu.MemorySpace.SMEM),
        ),
        out_shape=(
            jax.ShapeDtypeStruct((B, 1, n), jnp.int32),
            jax.ShapeDtypeStruct((B,), jnp.int32),
        ),
        compiler_params=pltpu.CompilerParams(dimension_semantics=("parallel",)),
    )(d3)
    return idx.reshape(B, n), cnt


if __name__ == "__main__":
    key = jax.random.PRNGKey(0)
    k1, k2 = jax.random.split(key)

    # integer-valued floats in [0, 16) so `== 10` hits exactly on some entries
    data = jax.random.randint(k1, (N,), 0, 16).astype(jnp.float32)

    idx_pad, count = nonzero_eq10(data)
    jax.block_until_ready((idx_pad, count))

    # host-side dynamic slice (torch.nonzero's dynamic output shape).
    # TODO(synk): dynamic output shape of torch.nonzero (and .squeeze() producing a
    # 0-d tensor when there is exactly one match) has no static-shape Pallas
    # equivalent; kernel returns padded indices + count instead.
    k = int(count)
    got = np.asarray(idx_pad)[:k]
    exp = np.nonzero(np.asarray(data) == 10.0)[0]
    assert got.shape == exp.shape, (got.shape, exp.shape)
    assert np.array_equal(got, exp), (got, exp)
    assert np.all(np.asarray(idx_pad)[k:] == -1)

    # batched variant: many rows per pallas_call to amortize fixed launch overhead
    B = 4
    data_b = jax.random.randint(k2, (B, N), 0, 16).astype(jnp.float32)
    idx_b, count_b = nonzero_eq10_batched(data_b)
    jax.block_until_ready((idx_b, count_b))
    idx_b_np = np.asarray(idx_b)
    count_b_np = np.asarray(count_b)
    data_b_np = np.asarray(data_b)
    for b in range(B):
        kb = int(count_b_np[b])
        got_b = idx_b_np[b, :kb]
        exp_b = np.nonzero(data_b_np[b] == 10.0)[0]
        assert np.array_equal(got_b, exp_b), (b, got_b, exp_b)
        assert np.all(idx_b_np[b, kb:] == -1)

    print("KERNEL_OK")
</pallas_src>

<mosaic_0001>
module attributes {stable_mosaic.version = 11 : i64} {
  func.func @_nonzero_eq10_kernel(%arg0: memref<1x1x512xf32, #tpu.memory_space<vmem>>, %arg1: memref<1x1x512xi32, #tpu.memory_space<vmem>>, %arg2: memref<1xi32, #tpu.memory_space<smem>>) attributes {dimension_semantics = [], scalar_prefetch = 0 : i64, scratch_operands = 0 : i64, tpu.core_type = #tpu.core_type<tc>} {
    %c0 = arith.constant 0 : index
    %c0_0 = arith.constant 0 : index
    %c0_1 = arith.constant 0 : index
    %0 = vector.load %arg0[%c0, %c0_0, %c0_1] : memref<1x1x512xf32, #tpu.memory_space<vmem>>, vector<1x1x512xf32>
    %1 = vector.shape_cast %0 : vector<1x1x512xf32> to vector<1x512xf32>
    %cst = arith.constant 1.000000e+01 : f32
    %2 = vector.broadcast %cst : f32 to vector<1x512xf32>
    %3 = arith.cmpf oeq, %1, %2 : vector<1x512xf32>
    %4 = arith.extui %3 : vector<1x512xi1> to vector<1x512xi32>
    %5 = tpu.iota {dimensions = array<i32: 1>} : vector<1x512xi32>
    %c1_i32 = arith.constant 1 : i32
    %6 = tpu.dynamic_rotate %4 by %c1_i32 dim 1 : vector<1x512xi32>, i32 -> vector<1x512xi32>
    %c1_i32_2 = arith.constant 1 : i32
    %7 = vector.broadcast %c1_i32_2 : i32 to vector<1x512xi32>
    %8 = arith.cmpi sge, %5, %7 : vector<1x512xi32>
    %c0_i32 = arith.constant 0 : i32
    %9 = vector.broadcast %c0_i32 : i32 to vector<1x512xi32>
    %10 = arith.select %8, %6, %9 : vector<1x512xi1>, vector<1x512xi32>
    %11 = arith.addi %4, %10 : vector<1x512xi32>
    %c2_i32 = arith.constant 2 : i32
    %12 = tpu.dynamic_rotate %11 by %c2_i32 dim 1 : vector<1x512xi32>, i32 -> vector<1x512xi32>
    %c2_i32_3 = arith.constant 2 : i32
    %13 = vector.broadcast %c2_i32_3 : i32 to vector<1x512xi32>
    %14 = arith.cmpi sge, %5, %13 : vector<1x512xi32>
    %c0_i32_4 = arith.constant 0 : i32
    %15 = vector.broadcast %c0_i32_4 : i32 to vector<1x512xi32>
    %16 = arith.select %14, %12, %15 : vector<1x512xi1>, vector<1x512xi32>
    %17 = arith.addi %11, %16 : vector<1x512xi32>
    %c4_i32 = arith.constant 4 : i32
    %18 = tpu.dynamic_rotate %17 by %c4_i32 dim 1 : vector<1x512xi32>, i32 -> vector<1x512xi32>
    %c4_i32_5 = arith.constant 4 : i32
    %19 = vector.broadcast %c4_i32_5 : i32 to vector<1x512xi32>
    %20 = arith.cmpi sge, %5, %19 : vector<1x512xi32>
    %c0_i32_6 = arith.constant 0 : i32
    %21 = vector.broadcast %c0_i32_6 : i32 to vector<1x512xi32>
    %22 = arith.select %20, %18, %21 : vector<1x512xi1>, vector<1x512xi32>
    %23 = arith.addi %17, %22 : vector<1x512xi32>
    %c8_i32 = arith.constant 8 : i32
    %24 = tpu.dynamic_rotate %23 by %c8_i32 dim 1 : vector<1x512xi32>, i32 -> vector<1x512xi32>
    %c8_i32_7 = arith.constant 8 : i32
    %25 = vector.broadcast %c8_i32_7 : i32 to vector<1x512xi32>
    %26 = arith.cmpi sge, %5, %25 : vector<1x512xi32>
    %c0_i32_8 = arith.constant 0 : i32
    %27 = vector.broadcast %c0_i32_8 : i32 to vector<1x512xi32>
    %28 = arith.select %26, %24, %27 : vector<1x512xi1>, vector<1x512xi32>
    %29 = arith.addi %23, %28 : vector<1x512xi32>
    %c16_i32 = arith.constant 16 : i32
    %30 = tpu.dynamic_rotate %29 by %c16_i32 dim 1 : vector<1x512xi32>, i32 -> vector<1x512xi32>
    %c16_i32_9 = arith.constant 16 : i32
    %31 = vector.broadcast %c16_i32_9 : i32 to vector<1x512xi32>
    %32 = arith.cmpi sge, %5, %31 : vector<1x512xi32>
    %c0_i32_10 = arith.constant 0 : i32
    %33 = vector.broadcast %c0_i32_10 : i32 to vector<1x512xi32>
    %34 = arith.select %32, %30, %33 : vector<1x512xi1>, vector<1x512xi32>
    %35 = arith.addi %29, %34 : vector<1x512xi32>
    %c32_i32 = arith.constant 32 : i32
    %36 = tpu.dynamic_rotate %35 by %c32_i32 dim 1 : vector<1x512xi32>, i32 -> vector<1x512xi32>
    %c32_i32_11 = arith.constant 32 : i32
    %37 = vector.broadcast %c32_i32_11 : i32 to vector<1x512xi32>
    %38 = arith.cmpi sge, %5, %37 : vector<1x512xi32>
    %c0_i32_12 = arith.constant 0 : i32
    %39 = vector.broadcast %c0_i32_12 : i32 to vector<1x512xi32>
    %40 = arith.select %38, %36, %39 : vector<1x512xi1>, vector<1x512xi32>
    %41 = arith.addi %35, %40 : vector<1x512xi32>
    %c64_i32 = arith.constant 64 : i32
    %42 = tpu.dynamic_rotate %41 by %c64_i32 dim 1 : vector<1x512xi32>, i32 -> vector<1x512xi32>
    %c64_i32_13 = arith.constant 64 : i32
    %43 = vector.broadcast %c64_i32_13 : i32 to vector<1x512xi32>
    %44 = arith.cmpi sge, %5, %43 : vector<1x512xi32>
    %c0_i32_14 = arith.constant 0 : i32
    %45 = vector.broadcast %c0_i32_14 : i32 to vector<1x512xi32>
    %46 = arith.select %44, %42, %45 : vector<1x512xi1>, vector<1x512xi32>
    %47 = arith.addi %41, %46 : vector<1x512xi32>
    %c128_i32 = arith.constant 128 : i32
    %48 = tpu.dynamic_rotate %47 by %c128_i32 dim 1 : vector<1x512xi32>, i32 -> vector<1x512xi32>
    %c128_i32_15 = arith.constant 128 : i32
    %49 = vector.broadcast %c128_i32_15 : i32 to vector<1x512xi32>
    %50 = arith.cmpi sge, %5, %49 : vector<1x512xi32>
    %c0_i32_16 = arith.constant 0 : i32
    %51 = vector.broadcast %c0_i32_16 : i32 to vector<1x512xi32>
    %52 = arith.select %50, %48, %51 : vector<1x512xi1>, vector<1x512xi32>
    %53 = arith.addi %47, %52 : vector<1x512xi32>
    %c256_i32 = arith.constant 256 : i32
    %54 = tpu.dynamic_rotate %53 by %c256_i32 dim 1 : vector<1x512xi32>, i32 -> vector<1x512xi32>
    %c256_i32_17 = arith.constant 256 : i32
    %55 = vector.broadcast %c256_i32_17 : i32 to vector<1x512xi32>
    %56 = arith.cmpi sge, %5, %55 : vector<1x512xi32>
    %c0_i32_18 = arith.constant 0 : i32
    %57 = vector.broadcast %c0_i32_18 : i32 to vector<1x512xi32>
    %58 = arith.select %56, %54, %57 : vector<1x512xi1>, vector<1x512xi32>
    %59 = arith.addi %53, %58 : vector<1x512xi32>
    %60 = vector.shape_cast %59 : vector<1x512xi32> to vector<1x1x512xi32>
    %cst_19 = arith.constant dense<-2147483648> : vector<1xi32>
    %61 = vector.multi_reduction <maxsi>, %60, %cst_19 [1, 2] : vector<1x1x512xi32> to vector<1xi32>
    %62 = vector.shape_cast %61 : vector<1xi32> to vector<1x1x1xi32>
    %63 = vector.extract %62[0, 0, 0] : i32 from vector<1x1x1xi32>
    %c0_20 = arith.constant 0 : index
    %64 = memref.load %arg2[%c0_20] : memref<1xi32, #tpu.memory_space<smem>>
    memref.store %63, %arg2[%c0_20] : memref<1xi32, #tpu.memory_space<smem>>
    %65 = tpu.transpose %59, [1, 0] : vector<1x512xi32> -> vector<512x1xi32>
    %c0_i32_21 = arith.constant 0 : i32
    %66 = vector.broadcast %c0_i32_21 : i32 to vector<8x512xi32>
    %67 = vector.extract_strided_slice %65 {offsets = [0, 0], sizes = [8, 1], strides = [1, 1]} : vector<512x1xi32> to vector<8x1xi32>
    %68 = vector.broadcast %67 : vector<8x1xi32> to vector<8x512xi32>
    %69 = vector.broadcast %5 : vector<1x512xi32> to vector<8x512xi32>
    %70 = arith.cmpi sle, %68, %69 : vector<8x512xi32>
    %71 = arith.extui %70 : vector<8x512xi1> to vector<8x512xi32>
    %72 = arith.addi %66, %71 : vector<8x512xi32>
    %73 = vector.extract_strided_slice %65 {offsets = [8, 0], sizes = [8, 1], strides = [1, 1]} : vector<512x1xi32> to vector<8x1xi32>
    %74 = vector.broadcast %73 : vector<8x1xi32> to vector<8x512xi32>
    %75 = vector.broadcast %5 : vector<1x512xi32> to vector<8x512xi32>
    %76 = arith.cmpi sle, %74, %75 : vector<8x512xi32>
    %77 = arith.extui %76 : vector<8x512xi1> to vector<8x512xi32>
    %78 = arith.addi %72, %77 : vector<8x512xi32>
    %79 = vector.extract_strided_slice %65 {offsets = [16, 0], sizes = [8, 1], strides = [1, 1]} : vector<512x1xi32> to vector<8x1xi32>
    %80 = vector.broadcast %79 : vector<8x1xi32> to vector<8x512xi32>
    %81 = vector.broadcast %5 : vector<1x512xi32> to vector<8x512xi32>
    %82 = arith.cmpi sle, %80, %81 : vector<8x512xi32>
    %83 = arith.extui %82 : vector<8x512xi1> to vector<8x512xi32>
    %84 = arith.addi %78, %83 : vector<8x512xi32>
    %85 = vector.extract_strided_slice %65 {offsets = [24, 0], sizes = [8, 1], strides = [1, 1]} : vector<512x1xi32> to vector<8x1xi32>
    %86 = vector.broadcast %85 : vector<8x1xi32> to vector<8x512xi32>
    %87 = vector.broadcast %5 : vector<1x512xi32> to vector<8x512xi32>
    %88 = arith.cmpi sle, %86, %87 : vector<8x512xi32>
    %89 = arith.extui %88 : vector<8x512xi1> to vector<8x512xi32>
    %90 = arith.addi %84, %89 : vector<8x512xi32>
    %91 = vector.extract_strided_slice %65 {offsets = [32, 0], sizes = [8, 1], strides = [1, 1]} : vector<512x1xi32> to vector<8x1xi32>
    %92 = vector.broadcast %91 : vector<8x1xi32> to vector<8x512xi32>
    %93 = vector.broadcast %5 : vector<1x512xi32> to vector<8x512xi32>
    %94 = arith.cmpi sle, %92, %93 : vector<8x512xi32>
    %95 = arith.extui %94 : vector<8x512xi1> to vector<8x512xi32>
    %96 = arith.addi %90, %95 : vector<8x512xi32>
    %97 = vector.extract_strided_slice %65 {offsets = [40, 0], sizes = [8, 1], strides = [1, 1]} : vector<512x1xi32> to vector<8x1xi32>
    %98 = vector.broadcast %97 : vector<8x1xi32> to vector<8x512xi32>
    %99 = vector.broadcast %5 : vector<1x512xi32> to vector<8x512xi32>
    %100 = arith.cmpi sle, %98, %99 : vector<8x512xi32>
    %101 = arith.extui %100 : vector<8x512xi1> to vector<8x512xi32>
    %102 = arith.addi %96, %101 : vector<8x512xi32>
    %103 = vector.extract_strided_slice %65 {offsets = [48, 0], sizes = [8, 1], strides = [1, 1]} : vector<512x1xi32> to vector<8x1xi32>
    %104 = vector.broadcast %103 : vector<8x1xi32> to vector<8x512xi32>
    %105 = vector.broadcast %5 : vector<1x512xi32> to vector<8x512xi32>
    %106 = arith.cmpi sle, %104, %105 : vector<8x512xi32>
    %107 = arith.extui %106 : vector<8x512xi1> to vector<8x512xi32>
    %108 = arith.addi %102, %107 : vector<8x512xi32>
    %109 = vector.extract_strided_slice %65 {offsets = [56, 0], sizes = [8, 1], strides = [1, 1]} : vector<512x1xi32> to vector<8x1xi32>
    %110 = vector.broadcast %109 : vector<8x1xi32> to vector<8x512xi32>
    %111 = vector.broadcast %5 : vector<1x512xi32> to vector<8x512xi32>
    %112 = arith.cmpi sle, %110, %111 : vector<8x512xi32>
    %113 = arith.extui %112 : vector<8x512xi1> to vector<8x512xi32>
    %114 = arith.addi %108, %113 : vector<8x512xi32>
    %115 = vector.extract_strided_slice %65 {offsets = [64, 0], sizes = [8, 1], strides = [1, 1]} : vector<512x1xi32> to vector<8x1xi32>
    %116 = vector.broadcast %115 : vector<8x1xi32> to vector<8x512xi32>
    %117 = vector.broadcast %5 : vector<1x512xi32> to vector<8x512xi32>
    %118 = arith.cmpi sle, %116, %117 : vector<8x512xi32>
    %119 = arith.extui %118 : vector<8x512xi1> to vector<8x512xi32>
    %120 = arith.addi %114, %119 : vector<8x512xi32>
    %121 = vector.extract_strided_slice %65 {offsets = [72, 0], sizes = [8, 1], strides = [1, 1]} : vector<512x1xi32> to vector<8x1xi32>
    %122 = vector.broadcast %121 : vector<8x1xi32> to vector<8x512xi32>
    %123 = vector.broadcast %5 : vector<1x512xi32> to vector<8x512xi32>
    %124 = arith.cmpi sle, %122, %123 : vector<8x512xi32>
    %125 = arith.extui %124 : vector<8x512xi1> to vector<8x512xi32>
    %126 = arith.addi %120, %125 : vector<8x512xi32>
    %127 = vector.extract_strided_slice %65 {offsets = [80, 0], sizes = [8, 1], strides = [1, 1]} : vector<512x1xi32> to vector<8x1xi32>
    %128 = vector.broadcast %127 : vector<8x1xi32> to vector<8x512xi32>
    %129 = vector.broadcast %5 : vector<1x512xi32> to vector<8x512xi32>
    %130 = arith.cmpi sle, %128, %129 : vector<8x512xi32>
    %131 = arith.extui %130 : vector<8x512xi1> to vector<8x512xi32>
    %132 = arith.addi %126, %131 : vector<8x512xi32>
    %133 = vector.extract_strided_slice %65 {offsets = [88, 0], sizes = [8, 1], strides = [1, 1]} : vector<512x1xi32> to vector<8x1xi32>
    %134 = vector.broadcast %133 : vector<8x1xi32> to vector<8x512xi32>
    %135 = vector.broadcast %5 : vector<1x512xi32> to vector<8x512xi32>
    %136 = arith.cmpi sle, %134, %135 : vector<8x512xi32>
    %137 = arith.extui %136 : vector<8x512xi1> to vector<8x512xi32>
    %138 = arith.addi %132, %137 : vector<8x512xi32>
    %139 = vector.extract_strided_slice %65 {offsets = [96, 0], sizes = [8, 1], strides = [1, 1]} : vector<512x1xi32> to vector<8x1xi32>
    %140 = vector.broadcast %139 : vector<8x1xi32> to vector<8x512xi32>
    %141 = vector.broadcast %5 : vector<1x512xi32> to vector<8x512xi32>
    %142 = arith.cmpi sle, %140, %141 : vector<8x512xi32>
    %143 = arith.extui %142 : vector<8x512xi1> to vector<8x512xi32>
    %144 = arith.addi %138, %143 : vector<8x512xi32>
    %145 = vector.extract_strided_slice %65 {offsets = [104, 0], sizes = [8, 1], strides = [1, 1]} : vector<512x1xi32> to vector<8x1xi32>
    %146 = vector.broadcast %145 : vector<8x1xi32> to vector<8x512xi32>
    %147 = vector.broadcast %5 : vector<1x512xi32> to vector<8x512xi32>
    %148 = arith.cmpi sle, %146, %147 : vector<8x512xi32>
    %149 = arith.extui %148 : vector<8x512xi1> to vector<8x512xi32>
    %150 = arith.addi %144, %149 : vector<8x512xi32>
    %151 = vector.extract_strided_slice %65 {offsets = [112, 0], sizes = [8, 1], strides = [1, 1]} : vector<512x1xi32> to vector<8x1xi32>
    %152 = vector.broadcast %151 : vector<8x1xi32> to vector<8x512xi32>
    %153 = vector.broadcast %5 : vector<1x512xi32> to vector<8x512xi32>
    %154 = arith.cmpi sle, %152, %153 : vector<8x512xi32>
    %155 = arith.extui %154 : vector<8x512xi1> to vector<8x512xi32>
    %156 = arith.addi %150, %155 : vector<8x512xi32>
    %157 = vector.extract_strided_slice %65 {offsets = [120, 0], sizes = [8, 1], strides = [1, 1]} : vector<512x1xi32> to vector<8x1xi32>
    %158 = vector.broadcast %157 : vector<8x1xi32> to vector<8x512xi32>
    %159 = vector.broadcast %5 : vector<1x512xi32> to vector<8x512xi32>
    %160 = arith.cmpi sle, %158, %159 : vector<8x512xi32>
    %161 = arith.extui %160 : vector<8x512xi1> to vector<8x512xi32>
    %162 = arith.addi %156, %161 : vector<8x512xi32>
    %163 = vector.extract_strided_slice %65 {offsets = [128, 0], sizes = [8, 1], strides = [1, 1]} : vector<512x1xi32> to vector<8x1xi32>
    %164 = vector.broadcast %163 : vector<8x1xi32> to vector<8x512xi32>
    %165 = vector.broadcast %5 : vector<1x512xi32> to vector<8x512xi32>
    %166 = arith.cmpi sle, %164, %165 : vector<8x512xi32>
    %167 = arith.extui %166 : vector<8x512xi1> to vector<8x512xi32>
    %168 = arith.addi %162, %167 : vector<8x512xi32>
    %169 = vector.extract_strided_slice %65 {offsets = [136, 0], sizes = [8, 1], strides = [1, 1]} : vector<512x1xi32> to vector<8x1xi32>
    %170 = vector.broadcast %169 : vector<8x1xi32> to vector<8x512xi32>
    %171 = vector.broadcast %5 : vector<1x512xi32> to vector<8x512xi32>
    %172 = arith.cmpi sle, %170, %171 : vector<8x512xi32>
    %173 = arith.extui %172 : vector<8x512xi1> to vector<8x512xi32>
    %174 = arith.addi %168, %173 : vector<8x512xi32>
    %175 = vector.extract_strided_slice %65 {offsets = [144, 0], sizes = [8, 1], strides = [1, 1]} : vector<512x1xi32> to vector<8x1xi32>
    %176 = vector.broadcast %175 : vector<8x1xi32> to vector<8x512xi32>
    %177 = vector.broadcast %5 : vector<1x512xi32> to vector<8x512xi32>
    %178 = arith.cmpi sle, %176, %177 : vector<8x512xi32>
    %179 = arith.extui %178 : vector<8x512xi1> to vector<8x512xi32>
    %180 = arith.addi %174, %179 : vector<8x512xi32>
    %181 = vector.extract_strided_slice %65 {offsets = [152, 0], sizes = [8, 1], strides = [1, 1]} : vector<512x1xi32> to vector<8x1xi32>
    %182 = vector.broadcast %181 : vector<8x1xi32> to vector<8x512xi32>
    %183 = vector.broadcast %5 : vector<1x512xi32> to vector<8x512xi32>
    %184 = arith.cmpi sle, %182, %183 : vector<8x512xi32>
    %185 = arith.extui %184 : vector<8x512xi1> to vector<8x512xi32>
    %186 = arith.addi %180, %185 : vector<8x512xi32>
    %187 = vector.extract_strided_slice %65 {offsets = [160, 0], sizes = [8, 1], strides = [1, 1]} : vector<512x1xi32> to vector<8x1xi32>
    %188 = vector.broadcast %187 : vector<8x1xi32> to vector<8x512xi32>
    %189 = vector.broadcast %5 : vector<1x512xi32> to vector<8x512xi32>
    %190 = arith.cmpi sle, %188, %189 : vector<8x512xi32>
    %191 = arith.extui %190 : vector<8x512xi1> to vector<8x512xi32>
    %192 = arith.addi %186, %191 : vector<8x512xi32>
    %193 = vector.extract_strided_slice %65 {offsets = [168, 0], sizes = [8, 1], strides = [1, 1]} : vector<512x1xi32> to vector<8x1xi32>
    %194 = vector.broadcast %193 : vector<8x1xi32> to vector<8x512xi32>
    %195 = vector.broadcast %5 : vector<1x512xi32> to vector<8x512xi32>
    %196 = arith.cmpi sle, %194, %195 : vector<8x512xi32>
    %197 = arith.extui %196 : vector<8x512xi1> to vector<8x512xi32>
    %198 = arith.addi %192, %197 : vector<8x512xi32>
    %199 = vector.extract_strided_slice %65 {offsets = [176, 0], sizes = [8, 1], strides = [1, 1]} : vector<512x1xi32> to vector<8x1xi32>
    %200 = vector.broadcast %199 : vector<8x1xi32> to vector<8x512xi32>
    %201 = vector.broadcast %5 : vector<1x512xi32> to vector<8x512xi32>
    %202 = arith.cmpi sle, %200, %201 : vector<8x512xi32>
    %203 = arith.extui %202 : vector<8x512xi1> to vector<8x512xi32>
    %204 = arith.addi %198, %203 : vector<8x512xi32>
    %205 = vector.extract_strided_slice %65 {offsets = [184, 0], sizes = [8, 1], strides = [1, 1]} : vector<512x1xi32> to vector<8x1xi32>
    %206 = vector.broadcast %205 : vector<8x1xi32> to vector<8x512xi32>
    %207 = vector.broadcast %5 : vector<1x512xi32> to vector<8x512xi32>
    %208 = arith.cmpi sle, %206, %207 : vector<8x512xi32>
    %209 = arith.extui %208 : vector<8x512xi1> to vector<8x512xi32>
    %210 = arith.addi %204, %209 : vector<8x512xi32>
    %211 = vector.extract_strided_slice %65 {offsets = [192, 0], sizes = [8, 1], strides = [1, 1]} : vector<512x1xi32> to vector<8x1xi32>
    %212 = vector.broadcast %211 : vector<8x1xi32> to vector<8x512xi32>
    %213 = vector.broadcast %5 : vector<1x512xi32> to vector<8x512xi32>
    %214 = arith.cmpi sle, %212, %213 : vector<8x512xi32>
    %215 = arith.extui %214 : vector<8x512xi1> to vector<8x512xi32>
    %216 = arith.addi %210, %215 : vector<8x512xi32>
    %217 = vector.extract_strided_slice %65 {offsets = [200, 0], sizes = [8, 1], strides = [1, 1]} : vector<512x1xi32> to vector<8x1xi32>
    %218 = vector.broadcast %217 : vector<8x1xi32> to vector<8x512xi32>
    %219 = vector.broadcast %5 : vector<1x512xi32> to vector<8x512xi32>
    %220 = arith.cmpi sle, %218, %219 : vector<8x512xi32>
    %221 = arith.extui %220 : vector<8x512xi1> to vector<8x512xi32>
    %222 = arith.addi %216, %221 : vector<8x512xi32>
    %223 = vector.extract_strided_slice %65 {offsets = [208, 0], sizes = [8, 1], strides = [1, 1]} : vector<512x1xi32> to vector<8x1xi32>
    %224 = vector.broadcast %223 : vector<8x1xi32> to vector<8x512xi32>
    %225 = vector.broadcast %5 : vector<1x512xi32> to vector<8x512xi32>
    %226 = arith.cmpi sle, %224, %225 : vector<8x512xi32>
    %227 = arith.extui %226 : vector<8x512xi1> to vector<8x512xi32>
    %228 = arith.addi %222, %227 : vector<8x512xi32>
    %229 = vector.extract_strided_slice %65 {offsets = [216, 0], sizes = [8, 1], strides = [1, 1]} : vector<512x1xi32> to vector<8x1xi32>
    %230 = vector.broadcast %229 : vector<8x1xi32> to vector<8x512xi32>
    %231 = vector.broadcast %5 : vector<1x512xi32> to vector<8x512xi32>
    %232 = arith.cmpi sle, %230, %231 : vector<8x512xi32>
    %233 = arith.extui %232 : vector<8x512xi1> to vector<8x512xi32>
    %234 = arith.addi %228, %233 : vector<8x512xi32>
    %235 = vector.extract_strided_slice %65 {offsets = [224, 0], sizes = [8, 1], strides = [1, 1]} : vector<512x1xi32> to vector<8x1xi32>
    %236 = vector.broadcast %235 : vector<8x1xi32> to vector<8x512xi32>
    %237 = vector.broadcast %5 : vector<1x512xi32> to vector<8x512xi32>
    %238 = arith.cmpi sle, %236, %237 : vector<8x512xi32>
    %239 = arith.extui %238 : vector<8x512xi1> to vector<8x512xi32>
    %240 = arith.addi %234, %239 : vector<8x512xi32>
    %241 = vector.extract_strided_slice %65 {offsets = [232, 0], sizes = [8, 1], strides = [1, 1]} : vector<512x1xi32> to vector<8x1xi32>
    %242 = vector.broadcast %241 : vector<8x1xi32> to vector<8x512xi32>
    %243 = vector.broadcast %5 : vector<1x512xi32> to vector<8x512xi32>
    %244 = arith.cmpi sle, %242, %243 : vector<8x512xi32>
    %245 = arith.extui %244 : vector<8x512xi1> to vector<8x512xi32>
    %246 = arith.addi %240, %245 : vector<8x512xi32>
    %247 = vector.extract_strided_slice %65 {offsets = [240, 0], sizes = [8, 1], strides = [1, 1]} : vector<512x1xi32> to vector<8x1xi32>
    %248 = vector.broadcast %247 : vector<8x1xi32> to vector<8x512xi32>
    %249 = vector.broadcast %5 : vector<1x512xi32> to vector<8x512xi32>
    %250 = arith.cmpi sle, %248, %249 : vector<8x512xi32>
    %251 = arith.extui %250 : vector<8x512xi1> to vector<8x512xi32>
    %252 = arith.addi %246, %251 : vector<8x512xi32>
    %253 = vector.extract_strided_slice %65 {offsets = [248, 0], sizes = [8, 1], strides = [1, 1]} : vector<512x1xi32> to vector<8x1xi32>
    %254 = vector.broadcast %253 : vector<8x1xi32> to vector<8x512xi32>
    %255 = vector.broadcast %5 : vector<1x512xi32> to vector<8x512xi32>
    %256 = arith.cmpi sle, %254, %255 : vector<8x512xi32>
    %257 = arith.extui %256 : vector<8x512xi1> to vector<8x512xi32>
    %258 = arith.addi %252, %257 : vector<8x512xi32>
    %259 = vector.extract_strided_slice %65 {offsets = [256, 0], sizes = [8, 1], strides = [1, 1]} : vector<512x1xi32> to vector<8x1xi32>
    %260 = vector.broadcast %259 : vector<8x1xi32> to vector<8x512xi32>
    %261 = vector.broadcast %5 : vector<1x512xi32> to vector<8x512xi32>
    %262 = arith.cmpi sle, %260, %261 : vector<8x512xi32>
    %263 = arith.extui %262 : vector<8x512xi1> to vector<8x512xi32>
    %264 = arith.addi %258, %263 : vector<8x512xi32>
    %265 = vector.extract_strided_slice %65 {offsets = [264, 0], sizes = [8, 1], strides = [1, 1]} : vector<512x1xi32> to vector<8x1xi32>
    %266 = vector.broadcast %265 : vector<8x1xi32> to vector<8x512xi32>
    %267 = vector.broadcast %5 : vector<1x512xi32> to vector<8x512xi32>
    %268 = arith.cmpi sle, %266, %267 : vector<8x512xi32>
    %269 = arith.extui %268 : vector<8x512xi1> to vector<8x512xi32>
    %270 = arith.addi %264, %269 : vector<8x512xi32>
    %271 = vector.extract_strided_slice %65 {offsets = [272, 0], sizes = [8, 1], strides = [1, 1]} : vector<512x1xi32> to vector<8x1xi32>
    %272 = vector.broadcast %271 : vector<8x1xi32> to vector<8x512xi32>
    %273 = vector.broadcast %5 : vector<1x512xi32> to vector<8x512xi32>
    %274 = arith.cmpi sle, %272, %273 : vector<8x512xi32>
    %275 = arith.extui %274 : vector<8x512xi1> to vector<8x512xi32>
    %276 = arith.addi %270, %275 : vector<8x512xi32>
    %277 = vector.extract_strided_slice %65 {offsets = [280, 0], sizes = [8, 1], strides = [1, 1]} : vector<512x1xi32> to vector<8x1xi32>
    %278 = vector.broadcast %277 : vector<8x1xi32> to vector<8x512xi32>
    %279 = vector.broadcast %5 : vector<1x512xi32> to vector<8x512xi32>
    %280 = arith.cmpi sle, %278, %279 : vector<8x512xi32>
    %281 = arith.extui %280 : vector<8x512xi1> to vector<8x512xi32>
    %282 = arith.addi %276, %281 : vector<8x512xi32>
    %283 = vector.extract_strided_slice %65 {offsets = [288, 0], sizes = [8, 1], strides = [1, 1]} : vector<512x1xi32> to vector<8x1xi32>
    %284 = vector.broadcast %283 : vector<8x1xi32> to vector<8x512xi32>
    %285 = vector.broadcast %5 : vector<1x512xi32> to vector<8x512xi32>
    %286 = arith.cmpi sle, %284, %285 : vector<8x512xi32>
    %287 = arith.extui %286 : vector<8x512xi1> to vector<8x512xi32>
    %288 = arith.addi %282, %287 : vector<8x512xi32>
    %289 = vector.extract_strided_slice %65 {offsets = [296, 0], sizes = [8, 1], strides = [1, 1]} : vector<512x1xi32> to vector<8x1xi32>
    %290 = vector.broadcast %289 : vector<8x1xi32> to vector<8x512xi32>
    %291 = vector.broadcast %5 : vector<1x512xi32> to vector<8x512xi32>
    %292 = arith.cmpi sle, %290, %291 : vector<8x512xi32>
    %293 = arith.extui %292 : vector<8x512xi1> to vector<8x512xi32>
    %294 = arith.addi %288, %293 : vector<8x512xi32>
    %295 = vector.extract_strided_slice %65 {offsets = [304, 0], sizes = [8, 1], strides = [1, 1]} : vector<512x1xi32> to vector<8x1xi32>
    %296 = vector.broadcast %295 : vector<8x1xi32> to vector<8x512xi32>
    %297 = vector.broadcast %5 : vector<1x512xi32> to vector<8x512xi32>
    %298 = arith.cmpi sle, %296, %297 : vector<8x512xi32>
    %299 = arith.extui %298 : vector<8x512xi1> to vector<8x512xi32>
    %300 = arith.addi %294, %299 : vector<8x512xi32>
    %301 = vector.extract_strided_slice %65 {offsets = [312, 0], sizes = [8, 1], strides = [1, 1]} : vector<512x1xi32> to vector<8x1xi32>
    %302 = vector.broadcast %301 : vector<8x1xi32> to vector<8x512xi32>
    %303 = vector.broadcast %5 : vector<1x512xi32> to vector<8x512xi32>
    %304 = arith.cmpi sle, %302, %303 : vector<8x512xi32>
    %305 = arith.extui %304 : vector<8x512xi1> to vector<8x512xi32>
    %306 = arith.addi %300, %305 : vector<8x512xi32>
    %307 = vector.extract_strided_slice %65 {offsets = [320, 0], sizes = [8, 1], strides = [1, 1]} : vector<512x1xi32> to vector<8x1xi32>
    %308 = vector.broadcast %307 : vector<8x1xi32> to vector<8x512xi32>
    %309 = vector.broadcast %5 : vector<1x512xi32> to vector<8x512xi32>
    %310 = arith.cmpi sle, %308, %309 : vector<8x512xi32>
    %311 = arith.extui %310 : vector<8x512xi1> to vector<8x512xi32>
    %312 = arith.addi %306, %311 : vector<8x512xi32>
    %313 = vector.extract_strided_slice %65 {offsets = [328, 0], sizes = [8, 1], strides = [1, 1]} : vector<512x1xi32> to vector<8x1xi32>
    %314 = vector.broadcast %313 : vector<8x1xi32> to vector<8x512xi32>
    %315 = vector.broadcast %5 : vector<1x512xi32> to vector<8x512xi32>
    %316 = arith.cmpi sle, %314, %315 : vector<8x512xi32>
    %317 = arith.extui %316 : vector<8x512xi1> to vector<8x512xi32>
    %318 = arith.addi %312, %317 : vector<8x512xi32>
    %319 = vector.extract_strided_slice %65 {offsets = [336, 0], sizes = [8, 1], strides = [1, 1]} : vector<512x1xi32> to vector<8x1xi32>
    %320 = vector.broadcast %319 : vector<8x1xi32> to vector<8x512xi32>
    %321 = vector.broadcast %5 : vector<1x512xi32> to vector<8x512xi32>
    %322 = arith.cmpi sle, %320, %321 : vector<8x512xi32>
    %323 = arith.extui %322 : vector<8x512xi1> to vector<8x512xi32>
    %324 = arith.addi %318, %323 : vector<8x512xi32>
    %325 = vector.extract_strided_slice %65 {offsets = [344, 0], sizes = [8, 1], strides = [1, 1]} : vector<512x1xi32> to vector<8x1xi32>
    %326 = vector.broadcast %325 : vector<8x1xi32> to vector<8x512xi32>
    %327 = vector.broadcast %5 : vector<1x512xi32> to vector<8x512xi32>
    %328 = arith.cmpi sle, %326, %327 : vector<8x512xi32>
    %329 = arith.extui %328 : vector<8x512xi1> to vector<8x512xi32>
    %330 = arith.addi %324, %329 : vector<8x512xi32>
    %331 = vector.extract_strided_slice %65 {offsets = [352, 0], sizes = [8, 1], strides = [1, 1]} : vector<512x1xi32> to vector<8x1xi32>
    %332 = vector.broadcast %331 : vector<8x1xi32> to vector<8x512xi32>
    %333 = vector.broadcast %5 : vector<1x512xi32> to vector<8x512xi32>
    %334 = arith.cmpi sle, %332, %333 : vector<8x512xi32>
    %335 = arith.extui %334 : vector<8x512xi1> to vector<8x512xi32>
    %336 = arith.addi %330, %335 : vector<8x512xi32>
    %337 = vector.extract_strided_slice %65 {offsets = [360, 0], sizes = [8, 1], strides = [1, 1]} : vector<512x1xi32> to vector<8x1xi32>
    %338 = vector.broadcast %337 : vector<8x1xi32> to vector<8x512xi32>
    %339 = vector.broadcast %5 : vector<1x512xi32> to vector<8x512xi32>
    %340 = arith.cmpi sle, %338, %339 : vector<8x512xi32>
    %341 = arith.extui %340 : vector<8x512xi1> to vector<8x512xi32>
    %342 = arith.addi %336, %341 : vector<8x512xi32>
    %343 = vector.extract_strided_slice %65 {offsets = [368, 0], sizes = [8, 1], strides = [1, 1]} : vector<512x1xi32> to vector<8x1xi32>
    %344 = vector.broadcast %343 : vector<8x1xi32> to vector<8x512xi32>
    %345 = vector.broadcast %5 : vector<1x512xi32> to vector<8x512xi32>
    %346 = arith.cmpi sle, %344, %345 : vector<8x512xi32>
    %347 = arith.extui %346 : vector<8x512xi1> to vector<8x512xi32>
    %348 = arith.addi %342, %347 : vector<8x512xi32>
    %349 = vector.extract_strided_slice %65 {offsets = [376, 0], sizes = [8, 1], strides = [1, 1]} : vector<512x1xi32> to vector<8x1xi32>
    %350 = vector.broadcast %349 : vector<8x1xi32> to vector<8x512xi32>
    %351 = vector.broadcast %5 : vector<1x512xi32> to vector<8x512xi32>
    %352 = arith.cmpi sle, %350, %351 : vector<8x512xi32>
    %353 = arith.extui %352 : vector<8x512xi1> to vector<8x512xi32>
    %354 = arith.addi %348, %353 : vector<8x512xi32>
    %355 = vector.extract_strided_slice %65 {offsets = [384, 0], sizes = [8, 1], strides = [1, 1]} : vector<512x1xi32> to vector<8x1xi32>
    %356 = vector.broadcast %355 : vector<8x1xi32> to vector<8x512xi32>
    %357 = vector.broadcast %5 : vector<1x512xi32> to vector<8x512xi32>
    %358 = arith.cmpi sle, %356, %357 : vector<8x512xi32>
    %359 = arith.extui %358 : vector<8x512xi1> to vector<8x512xi32>
    %360 = arith.addi %354, %359 : vector<8x512xi32>
    %361 = vector.extract_strided_slice %65 {offsets = [392, 0], sizes = [8, 1], strides = [1, 1]} : vector<512x1xi32> to vector<8x1xi32>
    %362 = vector.broadcast %361 : vector<8x1xi32> to vector<8x512xi32>
    %363 = vector.broadcast %5 : vector<1x512xi32> to vector<8x512xi32>
    %364 = arith.cmpi sle, %362, %363 : vector<8x512xi32>
    %365 = arith.extui %364 : vector<8x512xi1> to vector<8x512xi32>
    %366 = arith.addi %360, %365 : vector<8x512xi32>
    %367 = vector.extract_strided_slice %65 {offsets = [400, 0], sizes = [8, 1], strides = [1, 1]} : vector<512x1xi32> to vector<8x1xi32>
    %368 = vector.broadcast %367 : vector<8x1xi32> to vector<8x512xi32>
    %369 = vector.broadcast %5 : vector<1x512xi32> to vector<8x512xi32>
    %370 = arith.cmpi sle, %368, %369 : vector<8x512xi32>
    %371 = arith.extui %370 : vector<8x512xi1> to vector<8x512xi32>
    %372 = arith.addi %366, %371 : vector<8x512xi32>
    %373 = vector.extract_strided_slice %65 {offsets = [408, 0], sizes = [8, 1], strides = [1, 1]} : vector<512x1xi32> to vector<8x1xi32>
    %374 = vector.broadcast %373 : vector<8x1xi32> to vector<8x512xi32>
    %375 = vector.broadcast %5 : vector<1x512xi32> to vector<8x512xi32>
    %376 = arith.cmpi sle, %374, %375 : vector<8x512xi32>
    %377 = arith.extui %376 : vector<8x512xi1> to vector<8x512xi32>
    %378 = arith.addi %372, %377 : vector<8x512xi32>
    %379 = vector.extract_strided_slice %65 {offsets = [416, 0], sizes = [8, 1], strides = [1, 1]} : vector<512x1xi32> to vector<8x1xi32>
    %380 = vector.broadcast %379 : vector<8x1xi32> to vector<8x512xi32>
    %381 = vector.broadcast %5 : vector<1x512xi32> to vector<8x512xi32>
    %382 = arith.cmpi sle, %380, %381 : vector<8x512xi32>
    %383 = arith.extui %382 : vector<8x512xi1> to vector<8x512xi32>
    %384 = arith.addi %378, %383 : vector<8x512xi32>
    %385 = vector.extract_strided_slice %65 {offsets = [424, 0], sizes = [8, 1], strides = [1, 1]} : vector<512x1xi32> to vector<8x1xi32>
    %386 = vector.broadcast %385 : vector<8x1xi32> to vector<8x512xi32>
    %387 = vector.broadcast %5 : vector<1x512xi32> to vector<8x512xi32>
    %388 = arith.cmpi sle, %386, %387 : vector<8x512xi32>
    %389 = arith.extui %388 : vector<8x512xi1> to vector<8x512xi32>
    %390 = arith.addi %384, %389 : vector<8x512xi32>
    %391 = vector.extract_strided_slice %65 {offsets = [432, 0], sizes = [8, 1], strides = [1, 1]} : vector<512x1xi32> to vector<8x1xi32>
    %392 = vector.broadcast %391 : vector<8x1xi32> to vector<8x512xi32>
    %393 = vector.broadcast %5 : vector<1x512xi32> to vector<8x512xi32>
    %394 = arith.cmpi sle, %392, %393 : vector<8x512xi32>
    %395 = arith.extui %394 : vector<8x512xi1> to vector<8x512xi32>
    %396 = arith.addi %390, %395 : vector<8x512xi32>
    %397 = vector.extract_strided_slice %65 {offsets = [440, 0], sizes = [8, 1], strides = [1, 1]} : vector<512x1xi32> to vector<8x1xi32>
    %398 = vector.broadcast %397 : vector<8x1xi32> to vector<8x512xi32>
    %399 = vector.broadcast %5 : vector<1x512xi32> to vector<8x512xi32>
    %400 = arith.cmpi sle, %398, %399 : vector<8x512xi32>
    %401 = arith.extui %400 : vector<8x512xi1> to vector<8x512xi32>
    %402 = arith.addi %396, %401 : vector<8x512xi32>
    %403 = vector.extract_strided_slice %65 {offsets = [448, 0], sizes = [8, 1], strides = [1, 1]} : vector<512x1xi32> to vector<8x1xi32>
    %404 = vector.broadcast %403 : vector<8x1xi32> to vector<8x512xi32>
    %405 = vector.broadcast %5 : vector<1x512xi32> to vector<8x512xi32>
    %406 = arith.cmpi sle, %404, %405 : vector<8x512xi32>
    %407 = arith.extui %406 : vector<8x512xi1> to vector<8x512xi32>
    %408 = arith.addi %402, %407 : vector<8x512xi32>
    %409 = vector.extract_strided_slice %65 {offsets = [456, 0], sizes = [8, 1], strides = [1, 1]} : vector<512x1xi32> to vector<8x1xi32>
    %410 = vector.broadcast %409 : vector<8x1xi32> to vector<8x512xi32>
    %411 = vector.broadcast %5 : vector<1x512xi32> to vector<8x512xi32>
    %412 = arith.cmpi sle, %410, %411 : vector<8x512xi32>
    %413 = arith.extui %412 : vector<8x512xi1> to vector<8x512xi32>
    %414 = arith.addi %408, %413 : vector<8x512xi32>
    %415 = vector.extract_strided_slice %65 {offsets = [464, 0], sizes = [8, 1], strides = [1, 1]} : vector<512x1xi32> to vector<8x1xi32>
    %416 = vector.broadcast %415 : vector<8x1xi32> to vector<8x512xi32>
    %417 = vector.broadcast %5 : vector<1x512xi32> to vector<8x512xi32>
    %418 = arith.cmpi sle, %416, %417 : vector<8x512xi32>
    %419 = arith.extui %418 : vector<8x512xi1> to vector<8x512xi32>
    %420 = arith.addi %414, %419 : vector<8x512xi32>
    %421 = vector.extract_strided_slice %65 {offsets = [472, 0], sizes = [8, 1], strides = [1, 1]} : vector<512x1xi32> to vector<8x1xi32>
    %422 = vector.broadcast %421 : vector<8x1xi32> to vector<8x512xi32>
    %423 = vector.broadcast %5 : vector<1x512xi32> to vector<8x512xi32>
    %424 = arith.cmpi sle, %422, %423 : vector<8x512xi32>
    %425 = arith.extui %424 : vector<8x512xi1> to vector<8x512xi32>
    %426 = arith.addi %420, %425 : vector<8x512xi32>
    %427 = vector.extract_strided_slice %65 {offsets = [480, 0], sizes = [8, 1], strides = [1, 1]} : vector<512x1xi32> to vector<8x1xi32>
    %428 = vector.broadcast %427 : vector<8x1xi32> to vector<8x512xi32>
    %429 = vector.broadcast %5 : vector<1x512xi32> to vector<8x512xi32>
    %430 = arith.cmpi sle, %428, %429 : vector<8x512xi32>
    %431 = arith.extui %430 : vector<8x512xi1> to vector<8x512xi32>
    %432 = arith.addi %426, %431 : vector<8x512xi32>
    %433 = vector.extract_strided_slice %65 {offsets = [488, 0], sizes = [8, 1], strides = [1, 1]} : vector<512x1xi32> to vector<8x1xi32>
    %434 = vector.broadcast %433 : vector<8x1xi32> to vector<8x512xi32>
    %435 = vector.broadcast %5 : vector<1x512xi32> to vector<8x512xi32>
    %436 = arith.cmpi sle, %434, %435 : vector<8x512xi32>
    %437 = arith.extui %436 : vector<8x512xi1> to vector<8x512xi32>
    %438 = arith.addi %432, %437 : vector<8x512xi32>
    %439 = vector.extract_strided_slice %65 {offsets = [496, 0], sizes = [8, 1], strides = [1, 1]} : vector<512x1xi32> to vector<8x1xi32>
    %440 = vector.broadcast %439 : vector<8x1xi32> to vector<8x512xi32>
    %441 = vector.broadcast %5 : vector<1x512xi32> to vector<8x512xi32>
    %442 = arith.cmpi sle, %440, %441 : vector<8x512xi32>
    %443 = arith.extui %442 : vector<8x512xi1> to vector<8x512xi32>
    %444 = arith.addi %438, %443 : vector<8x512xi32>
    %445 = vector.extract_strided_slice %65 {offsets = [504, 0], sizes = [8, 1], strides = [1, 1]} : vector<512x1xi32> to vector<8x1xi32>
    %446 = vector.broadcast %445 : vector<8x1xi32> to vector<8x512xi32>
    %447 = vector.broadcast %5 : vector<1x512xi32> to vector<8x512xi32>
    %448 = arith.cmpi sle, %446, %447 : vector<8x512xi32>
    %449 = arith.extui %448 : vector<8x512xi1> to vector<8x512xi32>
    %450 = arith.addi %444, %449 : vector<8x512xi32>
    %cst_22 = arith.constant dense<0> : vector<512xi32>
    %451 = vector.multi_reduction <add>, %450, %cst_22 [0] : vector<8x512xi32> to vector<512xi32>
    %452 = vector.shape_cast %451 : vector<512xi32> to vector<1x512xi32>
    %453 = vector.broadcast %63 : i32 to vector<1x512xi32>
    %454 = arith.cmpi slt, %5, %453 : vector<1x512xi32>
    %c-1_i32 = arith.constant -1 : i32
    %455 = vector.broadcast %c-1_i32 : i32 to vector<1x512xi32>
    %456 = arith.select %454, %452, %455 : vector<1x512xi1>, vector<1x512xi32>
    %457 = vector.shape_cast %456 : vector<1x512xi32> to vector<1x1x512xi32>
    %c0_23 = arith.constant 0 : index
    %c0_24 = arith.constant 0 : index
    %c0_25 = arith.constant 0 : index
    %458 = vector.load %arg1[%c0_23, %c0_24, %c0_25] : memref<1x1x512xi32, #tpu.memory_space<vmem>>, vector<1x1x512xi32>
    tpu.vector_store %arg1[%c0_23, %c0_24, %c0_25], %457 {strides = array<i32>} : memref<1x1x512xi32, #tpu.memory_space<vmem>>, vector<1x1x512xi32>,
    return
  }
}

</mosaic_0001>

<llo_original>
// kernel: tpu_custom_call.1
$region0: #{tpu_custom_call.1}
  #allocation0 [shape = 'u32[]', space=smem, size = 0x4, offset = 0x4, fixed_abs, tag = 'smem constant byte address 0x4 - core index']
  #allocation1 [shape = 'u32[144,128]{1,0:T(1,128)}', space=vmem, size = 0x12000, scoped, tag = 'internal scratch']
  %s0 = inlined_call_operand.hbm [shape: f32[1,1,512], index: 0, kind: input, shape index: {}]
  %s1 = inlined_call_operand.hbm [shape: s32[1,1,512], index: 1, kind: output, shape index: {0}]
  %s2 = inlined_call_operand.hbm [shape: s32[1], index: 2, kind: output, shape index: {1}]
  %3 = xla_tuple %s1, %s2
  %s4 = sld [smem:[#allocation0]]
  $region26: #{tpu_custom_call.1} parent=0
    _
  %s6 = ssub.s32 1, %s4
  %s7 = scalar_select 0, %s6, %s4
  $region1: #{tpu_custom_call.1} parent=0
    #allocation2 [shape = 'u8[2048]{0}', space=vmem, size = 0x800, scoped, tag = 'input window, operand 0, single buffered']
    #allocation3 [shape = 's32[1]{0}', space=sflag, size = 0x4, scoped, tag = 'scoped memory for tpu_custom_call.1']
    #allocation4 [shape = 's32[1]{0}', space=sflag, size = 0x4, scoped, tag = 'scoped memory for tpu_custom_call.1']
    #allocation5 [shape = 's32[1]{0}', space=sflag, size = 0x4, scoped, tag = 'scoped memory for tpu_custom_call.1']
    #allocation6 [shape = 'u8[2048]{0}', space=vmem, size = 0x800, scoped, tag = 'output window, operand 0, single buffered']
    #allocation7 [shape = 'u8[512]{0}', space=smem, size = 0x200, scoped, tag = 'output window, operand 1, single buffered']
    %8 = vsyncpa [#allocation3], 0
    %9 = vsyncpa [#allocation4], 0
    %10 = vsyncpa [#allocation5], 0
    // Predicated region
    $region2: #{tpu_custom_call.1} parent=1 // pred_check
      _
    $region3: #{tpu_custom_call.1} parent=1 // pred_check_branch
      %12 = sbr.rel (0) target = $region5
    $region4: #{tpu_custom_call.1} parent=1 // pred_region
      %s14 = ssub.s32 64, 64
      %15 = vsyncadd [#allocation3], %s14
      %s17 = sshll.u32 [#allocation2], 4
      %s18 = int_to_ptr.vmem [resolvable:$true] %s17
      %20 = dma.hbm_to_vmem [thread:$0]  %s0, 64, %s18, [#allocation3]
    $region5: #{tpu_custom_call.1} parent=1 // pred_fallthru
      _
    // Predicated region
    $region6: #{tpu_custom_call.1} parent=1 // pred_check
      _
    $region7: #{tpu_custom_call.1} parent=1 // pred_check_branch
      %22 = sbr.rel (0) target = $region9
    $region8: #{tpu_custom_call.1} parent=1 // pred_region
      %23 = dma.done [#allocation3], 64
    $region9: #{tpu_custom_call.1} parent=1 // pred_fallthru
      _
    %v24 = vld [vmem:[#allocation2] sm:$0xf]
    %vm25 = vcmp.eq.f32.partialorder %v24, 10.0
    %v26 = vsel %vm25, 1, 0
    %v27 = vlaneseq
    %v28 = vand.u32 %v27, 127
    %v29 = vadd.s32 %v28, 128
    %v30 = vadd.s32 %v28, 256
    %v31 = vadd.s32 %v28, 384
    %v32 = vlaneseq
    %v33 = vshrl.u32 %v32, 7
    %v34 = vsub.s32 0, %v33
    %v35 = vrot.slane %v26, %v34
    %v36 = vlaneseq
    %v37 = vshrl.u32 %v36, 7
    %v38 = vsub.s32 1, %v37
    %v39 = vrot.slane %v26, %v38
    %v40 = vlaneseq
    %v41 = vshrl.u32 %v40, 7
    %v42 = vsub.s32 2, %v41
    %v43 = vrot.slane %v26, %v42
    %v44 = vlaneseq
    %v45 = vshrl.u32 %v44, 7
    %v46 = vsub.s32 3, %v45
    %v47 = vrot.slane %v26, %v46
    %48 = vrot.lane.b32.xlu0 %v35, 1
    %v49 = vpop.permute.xlu0 %48
    %50 = vrot.lane.b32.xlu0 %v39, 1
    %v51 = vpop.permute.xlu0 %50
    %52 = vrot.lane.b32.xlu0 %v43, 1
    %v53 = vpop.permute.xlu0 %52
    %54 = vrot.lane.b32.xlu0 %v47, 1
    %v55 = vpop.permute.xlu0 %54
    %vm56 = vcmp.lt.s32.totalorder %v28, 1
    %v57 = vsel %vm56, %v53, %v55
    %v58 = vsel %vm56, %v51, %v53
    %v59 = vsel %vm56, %v49, %v51
    %v60 = vsel %vm56, %v55, %v49
    %vm61 = vcmp.ge.s32.totalorder %v28, 1
    %vm62 = vcmp.ge.s32.totalorder %v29, 1
    %vm63 = vcmp.ge.s32.totalorder %v30, 1
    %vm64 = vcmp.ge.s32.totalorder %v31, 1
    %v65 = vsel %vm61, %v60, 0
    %v66 = vsel %vm62, %v59, 0
    %v67 = vsel %vm63, %v58, 0
    %v68 = vsel %vm64, %v57, 0
    %v69 = vcombine.low %v65, %v66
    %v70 = vcombine.low %v67, %v68
    %v72 = vunpack.c.l.s4 1966171168
    %v73 = vunpack.c.0.s8 %v72
    %v74 = vlaneseq
    %v75 = vshrl.u32 %v74, 7
    %v76 = vsub.s32 %v73, %v75
    %v77 = vrot.slane %v69, %v76
    %v79 = vunpack.c.l.s4 1966171168
    %v80 = vunpack.c.0.s8 %v79
    %v81 = vlaneseq
    %v82 = vshrl.u32 %v81, 7
    %v83 = vsub.s32 %v80, %v82
    %v84 = vrot.slane %v70, %v83
    %v85 = vcombine.low %v77, %v84
    %v87 = vunpack.c.l.s4 1966171168
    %v88 = vunpack.c.0.s8 %v87
    %v89 = vlaneseq
    %v90 = vshrl.u32 %v89, 7
    %v91 = vsub.s32 %v88, %v90
    %v92 = vrot.slane %v85, %v91
    %v93 = vadd.s32 %v26, %v92
    %v94 = vlaneseq
    %v95 = vshrl.u32 %v94, 7
    %v96 = vsub.s32 0, %v95
    %v97 = vrot.slane %v93, %v96
    %v98 = vlaneseq
    %v99 = vshrl.u32 %v98, 7
    %v100 = vsub.s32 1, %v99
    %v101 = vrot.slane %v93, %v100
    %v102 = vlaneseq
    %v103 = vshrl.u32 %v102, 7
    %v104 = vsub.s32 2, %v103
    %v105 = vrot.slane %v93, %v104
    %v106 = vlaneseq
    %v107 = vshrl.u32 %v106, 7
    %v108 = vsub.s32 3, %v107
    %v109 = vrot.slane %v93, %v108
    %110 = vrot.lane.b32.xlu0 %v97, 2
    %v111 = vpop.permute.xlu0 %110
    %112 = vrot.lane.b32.xlu0 %v101, 2
    %v113 = vpop.permute.xlu0 %112
    %114 = vrot.lane.b32.xlu0 %v105, 2
    %v115 = vpop.permute.xlu0 %114
    %116 = vrot.lane.b32.xlu0 %v109, 2
    %v117 = vpop.permute.xlu0 %116
    %vm118 = vcmp.lt.s32.totalorder %v28, 2
    %v119 = vsel %vm118, %v115, %v117
    %v120 = vsel %vm118, %v113, %v115
    %v121 = vsel %vm118, %v111, %v113
    %v122 = vsel %vm118, %v117, %v111
    %vm123 = vcmp.ge.s32.totalorder %v28, 2
    %vm124 = vcmp.ge.s32.totalorder %v29, 2
    %vm125 = vcmp.ge.s32.totalorder %v30, 2
    %vm126 = vcmp.ge.s32.totalorder %v31, 2
    %v127 = vsel %vm123, %v122, 0
    %v128 = vsel %vm124, %v121, 0
    %v129 = vsel %vm125, %v120, 0
    %v130 = vsel %vm126, %v119, 0
    %v131 = vcombine.low %v127, %v128
    %v132 = vcombine.low %v129, %v130
    %v134 = vunpack.c.l.s4 1966171168
    %v135 = vunpack.c.0.s8 %v134
    %v136 = vlaneseq
    %v137 = vshrl.u32 %v136, 7
    %v138 = vsub.s32 %v135, %v137
    %v139 = vrot.slane %v131, %v138
    %v141 = vunpack.c.l.s4 1966171168
    %v142 = vunpack.c.0.s8 %v141
    %v143 = vlaneseq
    %v144 = vshrl.u32 %v143, 7
    %v145 = vsub.s32 %v142, %v144
    %v146 = vrot.slane %v132, %v145
    %v147 = vcombine.low %v139, %v146
    %v149 = vunpack.c.l.s4 1966171168
    %v150 = vunpack.c.0.s8 %v149
    %v151 = vlaneseq
    %v152 = vshrl.u32 %v151, 7
    %v153 = vsub.s32 %v150, %v152
    %v154 = vrot.slane %v147, %v153
    %v155 = vadd.s32 %v93, %v154
    %v156 = vlaneseq
    %v157 = vshrl.u32 %v156, 7
    %v158 = vsub.s32 0, %v157
    %v159 = vrot.slane %v155, %v158
    %v160 = vlaneseq
    %v161 = vshrl.u32 %v160, 7
    %v162 = vsub.s32 1, %v161
    %v163 = vrot.slane %v155, %v162
    %v164 = vlaneseq
    %v165 = vshrl.u32 %v164, 7
    %v166 = vsub.s32 2, %v165
    %v167 = vrot.slane %v155, %v166
    %v168 = vlaneseq
    %v169 = vshrl.u32 %v168, 7
    %v170 = vsub.s32 3, %v169
    %v171 = vrot.slane %v155, %v170
    %172 = vrot.lane.b32.xlu0 %v159, 4
    %v173 = vpop.permute.xlu0 %172
    %174 = vrot.lane.b32.xlu0 %v163, 4
    %v175 = vpop.permute.xlu0 %174
    %176 = vrot.lane.b32.xlu0 %v167, 4
    %v177 = vpop.permute.xlu0 %176
    %178 = vrot.lane.b32.xlu0 %v171, 4
    %v179 = vpop.permute.xlu0 %178
    %vm180 = vcmp.lt.s32.totalorder %v28, 4
    %v181 = vsel %vm180, %v177, %v179
    %v182 = vsel %vm180, %v175, %v177
    %v183 = vsel %vm180, %v173, %v175
    %v184 = vsel %vm180, %v179, %v173
    %vm185 = vcmp.ge.s32.totalorder %v28, 4
    %vm186 = vcmp.ge.s32.totalorder %v29, 4
    %vm187 = vcmp.ge.s32.totalorder %v30, 4
    %vm188 = vcmp.ge.s32.totalorder %v31, 4
    %v189 = vsel %vm185, %v184, 0
    %v190 = vsel %vm186, %v183, 0
    %v191 = vsel %vm187, %v182, 0
    %v192 = vsel %vm188, %v181, 0
    %v193 = vcombine.low %v189, %v190
    %v194 = vcombine.low %v191, %v192
    %v196 = vunpack.c.l.s4 1966171168
    %v197 = vunpack.c.0.s8 %v196
    %v198 = vlaneseq
    %v199 = vshrl.u32 %v198, 7
    %v200 = vsub.s32 %v197, %v199
    %v201 = vrot.slane %v193, %v200
    %v203 = vunpack.c.l.s4 1966171168
    %v204 = vunpack.c.0.s8 %v203
    %v205 = vlaneseq
    %v206 = vshrl.u32 %v205, 7
    %v207 = vsub.s32 %v204, %v206
    %v208 = vrot.slane %v194, %v207
    %v209 = vcombine.low %v201, %v208
    %v211 = vunpack.c.l.s4 1966171168
    %v212 = vunpack.c.0.s8 %v211
    %v213 = vlaneseq
    %v214 = vshrl.u32 %v213, 7
    %v215 = vsub.s32 %v212, %v214
    %v216 = vrot.slane %v209, %v215
    %v217 = vadd.s32 %v155, %v216
    %v218 = vlaneseq
    %v219 = vshrl.u32 %v218, 7
    %v220 = vsub.s32 0, %v219
    %v221 = vrot.slane %v217, %v220
    %v222 = vlaneseq
    %v223 = vshrl.u32 %v222, 7
    %v224 = vsub.s32 1, %v223
    %v225 = vrot.slane %v217, %v224
    %v226 = vlaneseq
    %v227 = vshrl.u32 %v226, 7
    %v228 = vsub.s32 2, %v227
    %v229 = vrot.slane %v217, %v228
    %v230 = vlaneseq
    %v231 = vshrl.u32 %v230, 7
    %v232 = vsub.s32 3, %v231
    %v233 = vrot.slane %v217, %v232
    %234 = vrot.lane.b32.xlu0 %v221, 8
    %v235 = vpop.permute.xlu0 %234
    %236 = vrot.lane.b32.xlu0 %v225, 8
    %v237 = vpop.permute.xlu0 %236
    %238 = vrot.lane.b32.xlu0 %v229, 8
    %v239 = vpop.permute.xlu0 %238
    %240 = vrot.lane.b32.xlu0 %v233, 8
    %v241 = vpop.permute.xlu0 %240
    %vm242 = vcmp.lt.s32.totalorder %v28, 8
    %v243 = vsel %vm242, %v239, %v241
    %v244 = vsel %vm242, %v237, %v239
    %v245 = vsel %vm242, %v235, %v237
    %v246 = vsel %vm242, %v241, %v235
    %vm247 = vcmp.ge.s32.totalorder %v28, 8
    %vm248 = vcmp.ge.s32.totalorder %v29, 8
    %vm249 = vcmp.ge.s32.totalorder %v30, 8
    %vm250 = vcmp.ge.s32.totalorder %v31, 8
    %v251 = vsel %vm247, %v246, 0
    %v252 = vsel %vm248, %v245, 0
    %v253 = vsel %vm249, %v244, 0
    %v254 = vsel %vm250, %v243, 0
    %v255 = vcombine.low %v251, %v252
    %v256 = vcombine.low %v253, %v254
    %v258 = vunpack.c.l.s4 1966171168
    %v259 = vunpack.c.0.s8 %v258
    %v260 = vlaneseq
    %v261 = vshrl.u32 %v260, 7
    %v262 = vsub.s32 %v259, %v261
    %v263 = vrot.slane %v255, %v262
    %v265 = vunpack.c.l.s4 1966171168
    %v266 = vunpack.c.0.s8 %v265
    %v267 = vlaneseq
    %v268 = vshrl.u32 %v267, 7
    %v269 = vsub.s32 %v266, %v268
    %v270 = vrot.slane %v256, %v269
    %v271 = vcombine.low %v263, %v270
    %v273 = vunpack.c.l.s4 1966171168
    %v274 = vunpack.c.0.s8 %v273
    %v275 = vlaneseq
    %v276 = vshrl.u32 %v275, 7
    %v277 = vsub.s32 %v274, %v276
    %v278 = vrot.slane %v271, %v277
    %v279 = vadd.s32 %v217, %v278
    %v280 = vlaneseq
    %v281 = vshrl.u32 %v280, 7
    %v282 = vsub.s32 0, %v281
    %v283 = vrot.slane %v279, %v282
    %v284 = vlaneseq
    %v285 = vshrl.u32 %v284, 7
    %v286 = vsub.s32 1, %v285
    %v287 = vrot.slane %v279, %v286
    %v288 = vlaneseq
    %v289 = vshrl.u32 %v288, 7
    %v290 = vsub.s32 2, %v289
    %v291 = vrot.slane %v279, %v290
    %v292 = vlaneseq
    %v293 = vshrl.u32 %v292, 7
    %v294 = vsub.s32 3, %v293
    %v295 = vrot.slane %v279, %v294
    %296 = vrot.lane.b32.xlu0 %v283, 16
    %v297 = vpop.permute.xlu0 %296
    %298 = vrot.lane.b32.xlu0 %v287, 16
    %v299 = vpop.permute.xlu0 %298
    %300 = vrot.lane.b32.xlu0 %v291, 16
    %v301 = vpop.permute.xlu0 %300
    %302 = vrot.lane.b32.xlu0 %v295, 16
    %v303 = vpop.permute.xlu0 %302
    %vm304 = vcmp.lt.s32.totalorder %v28, 16
    %v305 = vsel %vm304, %v301, %v303
    %v306 = vsel %vm304, %v299, %v301
    %v307 = vsel %vm304, %v297, %v299
    %v308 = vsel %vm304, %v303, %v297
    %vm309 = vcmp.ge.s32.totalorder %v28, 16
    %vm310 = vcmp.ge.s32.totalorder %v29, 16
    %vm311 = vcmp.ge.s32.totalorder %v30, 16
    %vm312 = vcmp.ge.s32.totalorder %v31, 16
    %v313 = vsel %vm309, %v308, 0
    %v314 = vsel %vm310, %v307, 0
    %v315 = vsel %vm311, %v306, 0
    %v316 = vsel %vm312, %v305, 0
    %v317 = vcombine.low %v313, %v314
    %v318 = vcombine.low %v315, %v316
    %v320 = vunpack.c.l.s4 1966171168
    %v321 = vunpack.c.0.s8 %v320
    %v322 = vlaneseq
    %v323 = vshrl.u32 %v322, 7
    %v324 = vsub.s32 %v321, %v323
    %v325 = vrot.slane %v317, %v324
    %v327 = vunpack.c.l.s4 1966171168
    %v328 = vunpack.c.0.s8 %v327
    %v329 = vlaneseq
    %v330 = vshrl.u32 %v329, 7
    %v331 = vsub.s32 %v328, %v330
    %v332 = vrot.slane %v318, %v331
    %v333 = vcombine.low %v325, %v332
    %v335 = vunpack.c.l.s4 1966171168
    %v336 = vunpack.c.0.s8 %v335
    %v337 = vlaneseq
    %v338 = vshrl.u32 %v337, 7
    %v339 = vsub.s32 %v336, %v338
    %v340 = vrot.slane %v333, %v339
    %v341 = vadd.s32 %v279, %v340
    %v342 = vlaneseq
    %v343 = vshrl.u32 %v342, 7
    %v344 = vsub.s32 0, %v343
    %v345 = vrot.slane %v341, %v344
    %v346 = vlaneseq
    %v347 = vshrl.u32 %v346, 7
    %v348 = vsub.s32 1, %v347
    %v349 = vrot.slane %v341, %v348
    %v350 = vlaneseq
    %v351 = vshrl.u32 %v350, 7
    %v352 = vsub.s32 2, %v351
    %v353 = vrot.slane %v341, %v352
    %v354 = vlaneseq
    %v355 = vshrl.u32 %v354, 7
    %v356 = vsub.s32 3, %v355
    %v357 = vrot.slane %v341, %v356
    %358 = vrot.lane.b32.xlu0 %v345, 32
    %v359 = vpop.permute.xlu0 %358
    %360 = vrot.lane.b32.xlu0 %v349, 32
    %v361 = vpop.permute.xlu0 %360
    %362 = vrot.lane.b32.xlu0 %v353, 32
    %v363 = vpop.permute.xlu0 %362
    %364 = vrot.lane.b32.xlu0 %v357, 32
    %v365 = vpop.permute.xlu0 %364
    %vm366 = vcmp.lt.s32.totalorder %v28, 32
    %v367 = vsel %vm366, %v363, %v365
    %v368 = vsel %vm366, %v361, %v363
    %v369 = vsel %vm366, %v359, %v361
    %v370 = vsel %vm366, %v365, %v359
    %vm371 = vcmp.ge.s32.totalorder %v28, 32
    %vm372 = vcmp.ge.s32.totalorder %v29, 32
    %vm373 = vcmp.ge.s32.totalorder %v30, 32
    %vm374 = vcmp.ge.s32.totalorder %v31, 32
    %v375 = vsel %vm371, %v370, 0
    %v376 = vsel %vm372, %v369, 0
    %v377 = vsel %vm373, %v368, 0
    %v378 = vsel %vm374, %v367, 0
    %v379 = vcombine.low %v375, %v376
    %v380 = vcombine.low %v377, %v378
    %v382 = vunpack.c.l.s4 1966171168
    %v383 = vunpack.c.0.s8 %v382
    %v384 = vlaneseq
    %v385 = vshrl.u32 %v384, 7
    %v386 = vsub.s32 %v383, %v385
    %v387 = vrot.slane %v379, %v386
    %v389 = vunpack.c.l.s4 1966171168
    %v390 = vunpack.c.0.s8 %v389
    %v391 = vlaneseq
    %v392 = vshrl.u32 %v391, 7
    %v393 = vsub.s32 %v390, %v392
    %v394 = vrot.slane %v380, %v393
    %v395 = vcombine.low %v387, %v394
    %v397 = vunpack.c.l.s4 1966171168
    %v398 = vunpack.c.0.s8 %v397
    %v399 = vlaneseq
    %v400 = vshrl.u32 %v399, 7
    %v401 = vsub.s32 %v398, %v400
    %v402 = vrot.slane %v395, %v401
    %v403 = vadd.s32 %v341, %v402
    %v404 = vlaneseq
    %v405 = vshrl.u32 %v404, 7
    %v406 = vsub.s32 0, %v405
    %v407 = vrot.slane %v403, %v406
    %v408 = vlaneseq
    %v409 = vshrl.u32 %v408, 7
    %v410 = vsub.s32 1, %v409
    %v411 = vrot.slane %v403, %v410
    %v412 = vlaneseq
    %v413 = vshrl.u32 %v412, 7
    %v414 = vsub.s32 2, %v413
    %v415 = vrot.slane %v403, %v414
    %v416 = vlaneseq
    %v417 = vshrl.u32 %v416, 7
    %v418 = vsub.s32 3, %v417
    %v419 = vrot.slane %v403, %v418
    %420 = vrot.lane.b32.xlu0 %v407, 64
    %v421 = vpop.permute.xlu0 %420
    %422 = vrot.lane.b32.xlu0 %v411, 64
    %v423 = vpop.permute.xlu0 %422
    %424 = vrot.lane.b32.xlu0 %v415, 64
    %v425 = vpop.permute.xlu0 %424
    %426 = vrot.lane.b32.xlu0 %v419, 64
    %v427 = vpop.permute.xlu0 %426
    %vm428 = vcmp.lt.s32.totalorder %v28, 64
    %v429 = vsel %vm428, %v425, %v427
    %v430 = vsel %vm428, %v423, %v425
    %v431 = vsel %vm428, %v421, %v423
    %v432 = vsel %vm428, %v427, %v421
    %vm433 = vcmp.ge.s32.totalorder %v28, 64
    %vm434 = vcmp.ge.s32.totalorder %v29, 64
    %vm435 = vcmp.ge.s32.totalorder %v30, 64
    %vm436 = vcmp.ge.s32.totalorder %v31, 64
    %v437 = vsel %vm433, %v432, 0
    %v438 = vsel %vm434, %v431, 0
    %v439 = vsel %vm435, %v430, 0
    %v440 = vsel %vm436, %v429, 0
    %v441 = vcombine.low %v437, %v438
    %v442 = vcombine.low %v439, %v440
    %v444 = vunpack.c.l.s4 1966171168
    %v445 = vunpack.c.0.s8 %v444
    %v446 = vlaneseq
    %v447 = vshrl.u32 %v446, 7
    %v448 = vsub.s32 %v445, %v447
    %v449 = vrot.slane %v441, %v448
    %v451 = vunpack.c.l.s4 1966171168
    %v452 = vunpack.c.0.s8 %v451
    %v453 = vlaneseq
    %v454 = vshrl.u32 %v453, 7
    %v455 = vsub.s32 %v452, %v454
    %v456 = vrot.slane %v442, %v455
    %v457 = vcombine.low %v449, %v456
    %v459 = vunpack.c.l.s4 1966171168
    %v460 = vunpack.c.0.s8 %v459
    %v461 = vlaneseq
    %v462 = vshrl.u32 %v461, 7
    %v463 = vsub.s32 %v460, %v462
    %v464 = vrot.slane %v457, %v463
    %v465 = vadd.s32 %v403, %v464
    %v466 = vlaneseq
    %v467 = vshrl.u32 %v466, 7
    %v468 = vsub.s32 0, %v467
    %v469 = vrot.slane %v465, %v468
    %v470 = vlaneseq
    %v471 = vshrl.u32 %v470, 7
    %v472 = vsub.s32 1, %v471
    %v473 = vrot.slane %v465, %v472
    %v474 = vlaneseq
    %v475 = vshrl.u32 %v474, 7
    %v476 = vsub.s32 2, %v475
    %v477 = vrot.slane %v465, %v476
    %v478 = vlaneseq
    %v479 = vshrl.u32 %v478, 7
    %v480 = vsub.s32 3, %v479
    %v481 = vrot.slane %v465, %v480
    %vm482 = vcmp.ge.s32.totalorder %v28, 128
    %vm483 = vcmp.ge.s32.totalorder %v29, 128
    %vm484 = vcmp.ge.s32.totalorder %v30, 128
    %vm485 = vcmp.ge.s32.totalorder %v31, 128
    %v486 = vsel %vm482, %v481, 0
    %v487 = vsel %vm483, %v469, 0
    %v488 = vsel %vm484, %v473, 0
    %v489 = vsel %vm485, %v477, 0
    %v490 = vcombine.low %v486, %v487
    %v491 = vcombine.low %v488, %v489
    %v493 = vunpack.c.l.s4 1966171168
    %v494 = vunpack.c.0.s8 %v493
    %v495 = vlaneseq
    %v496 = vshrl.u32 %v495, 7
    %v497 = vsub.s32 %v494, %v496
    %v498 = vrot.slane %v490, %v497
    %v500 = vunpack.c.l.s4 1966171168
    %v501 = vunpack.c.0.s8 %v500
    %v502 = vlaneseq
    %v503 = vshrl.u32 %v502, 7
    %v504 = vsub.s32 %v501, %v503
    %v505 = vrot.slane %v491, %v504
    %v506 = vcombine.low %v498, %v505
    %v508 = vunpack.c.l.s4 1966171168
    %v509 = vunpack.c.0.s8 %v508
    %v510 = vlaneseq
    %v511 = vshrl.u32 %v510, 7
    %v512 = vsub.s32 %v509, %v511
    %v513 = vrot.slane %v506, %v512
    %v514 = vadd.s32 %v465, %v513
    %v515 = vlaneseq
    %v516 = vshrl.u32 %v515, 7
    %v517 = vsub.s32 0, %v516
    %v518 = vrot.slane %v514, %v517
    %v519 = vlaneseq
    %v520 = vshrl.u32 %v519, 7
    %v521 = vsub.s32 1, %v520
    %v522 = vrot.slane %v514, %v521
    %v523 = vlaneseq
    %v524 = vshrl.u32 %v523, 7
    %v525 = vsub.s32 2, %v524
    %v526 = vrot.slane %v514, %v525
    %v527 = vlaneseq
    %v528 = vshrl.u32 %v527, 7
    %v529 = vsub.s32 3, %v528
    %v530 = vrot.slane %v514, %v529
    %vm531 = vcmp.ge.s32.totalorder %v28, 256
    %vm532 = vcmp.ge.s32.totalorder %v29, 256
    %vm533 = vcmp.ge.s32.totalorder %v30, 256
    %vm534 = vcmp.ge.s32.totalorder %v31, 256
    %v535 = vsel %vm531, %v526, 0
    %v536 = vsel %vm532, %v530, 0
    %v537 = vsel %vm533, %v518, 0
    %v538 = vsel %vm534, %v522, 0
    %v539 = vcombine.low %v535, %v536
    %v540 = vcombine.low %v537, %v538
    %v542 = vunpack.c.l.s4 1966171168
    %v543 = vunpack.c.0.s8 %v542
    %v544 = vlaneseq
    %v545 = vshrl.u32 %v544, 7
    %v546 = vsub.s32 %v543, %v545
    %v547 = vrot.slane %v539, %v546
    %v549 = vunpack.c.l.s4 1966171168
    %v550 = vunpack.c.0.s8 %v549
    %v551 = vlaneseq
    %v552 = vshrl.u32 %v551, 7
    %v553 = vsub.s32 %v550, %v552
    %v554 = vrot.slane %v540, %v553
    %v555 = vcombine.low %v547, %v554
    %v557 = vunpack.c.l.s4 1966171168
    %v558 = vunpack.c.0.s8 %v557
    %v559 = vlaneseq
    %v560 = vshrl.u32 %v559, 7
    %v561 = vsub.s32 %v558, %v560
    %v562 = vrot.slane %v555, %v561
    %v563 = vadd.s32 %v514, %v562
    %v564 = vlaneseq
    %v565 = vshrl.u32 %v564, 7
    %v566 = vsub.s32 0, %v565
    %v567 = vrot.slane %v563, %v566
    %v568 = vlaneseq
    %v569 = vshrl.u32 %v568, 7
    %v570 = vsub.s32 1, %v569
    %v571 = vrot.slane %v563, %v570
    %v572 = vlaneseq
    %v573 = vshrl.u32 %v572, 7
    %v574 = vsub.s32 2, %v573
    %v575 = vrot.slane %v563, %v574
    %v576 = vlaneseq
    %v577 = vshrl.u32 %v576, 7
    %v578 = vsub.s32 3, %v577
    %v579 = vrot.slane %v563, %v578
    %vm580 = vcmask 1040384
    %v581 = vsel %vm580, %v567, 2147483648
    %v582 = vsel %vm580, %v571, 2147483648
    %v583 = vsel %vm580, %v575, 2147483648
    %v584 = vsel %vm580, %v579, 2147483648
    %vm585 = vcmp.gt.s32.totalorder %v581, %v582
    %v586 = vsel %vm585, %v581, %v582
    %vm587 = vcmp.gt.s32.totalorder %v583, %v584
    %v588 = vsel %vm587, %v583, %v584
    %vm589 = vcmp.gt.s32.totalorder %v586, %v588
    %v590 = vsel %vm589, %v586, %v588
    %v591 = vand.u32 %v590, 65535
    %v592 = vshra.s32 %v590, 16
    %v593 = vcvt.s32.f32 %v591
    %v594 = vcvt.s32.f32 %v592
    %595 = vmax.xlane.f32.xlu0 %v594
    %v596 = vpop.xlane.xlu0 %595
    %vm597 = vcmp.eq.f32.partialorder %v594, %v596
    %v598 = vsel %vm597, %v593, -inf
    %599 = vmax.xlane.f32.xlu0 %v598
    %v600 = vpop.xlane.xlu0 %599
    %v601 = vcvt.f32.s32 %v600
    %v602 = vcvt.f32.s32 %v596
    %v603 = vshll.u32 %v602, 16
    %v604 = vadd.s32 %v603, %v601
    %v605 = vrot.slane %v604, 4
    %vm606 = vcmp.gt.s32.totalorder %v604, %v605
    %v607 = vsel %vm606, %v604, %v605
    %v608 = vrot.slane %v607, 2
    %vm609 = vcmp.gt.s32.totalorder %v607, %v608
    %v610 = vsel %vm609, %v607, %v608
    %v611 = vrot.slane %v610, 1
    %vm612 = vcmp.gt.s32.totalorder %v610, %v611
    %v613 = vsel %vm612, %v610, %v611
    %s614 = vtos %v613
    %s615 = scalar_lea.smem [#allocation7], 0
    %616 = sst [smem:[%s615]] %s614
    %617 = vxpose.xlu0.b32.start [1/16] %v567, 128
    %618 = vxpose.xlu0.b32.cont [2/16] 0, 128
    %619 = vxpose.xlu0.b32.cont [3/16] 0, 128
    %620 = vxpose.xlu0.b32.cont [4/16] 0, 128
    %621 = vxpose.xlu0.b32.cont [5/16] 0, 128
    %622 = vxpose.xlu0.b32.cont [6/16] 0, 128
    %623 = vxpose.xlu0.b32.cont [7/16] 0, 128
    %624 = vxpose.xlu0.b32.cont [8/16] 0, 128
    %625 = vxpose.xlu0.b32.cont [9/16] 0, 128
    %626 = vxpose.xlu0.b32.cont [10/16] 0, 128
    %627 = vxpose.xlu0.b32.cont [11/16] 0, 128
    %628 = vxpose.xlu0.b32.cont [12/16] 0, 128
    %629 = vxpose.xlu0.b32.cont [13/16] 0, 128
    %630 = vxpose.xlu0.b32.cont [14/16] 0, 128
    %631 = vxpose.xlu0.b32.cont [15/16] 0, 128
    %632 = vxpose.xlu0.b32.end [16/16] 0, 128
    %v633 = vpop.trf.xlu0
    %v634 = vpop.trf.xlu0
    %v635 = vpop.trf.xlu0
    %v636 = vpop.trf.xlu0
    %v637 = vpop.trf.xlu0
    %v638 = vpop.trf.xlu0
    %v639 = vpop.trf.xlu0
    %v640 = vpop.trf.xlu0
    %v641 = vpop.trf.xlu0
    %v642 = vpop.trf.xlu0
    %v643 = vpop.trf.xlu0
    %v644 = vpop.trf.xlu0
    %v645 = vpop.trf.xlu0
    %v646 = vpop.trf.xlu0
    %v647 = vpop.trf.xlu0
    %v648 = vpop.trf.xlu0
    %649 = vxpose.xlu0.b32.start [1/16] %v571, 128
    %650 = vxpose.xlu0.b32.cont [2/16] 0, 128
    %651 = vxpose.xlu0.b32.cont [3/16] 0, 128
    %652 = vxpose.xlu0.b32.cont [4/16] 0, 128
    %653 = vxpose.xlu0.b32.cont [5/16] 0, 128
    %654 = vxpose.xlu0.b32.cont [6/16] 0, 128
    %655 = vxpose.xlu0.b32.cont [7/16] 0, 128
    %656 = vxpose.xlu0.b32.cont [8/16] 0, 128
    %657 = vxpose.xlu0.b32.cont [9/16] 0, 128
    %658 = vxpose.xlu0.b32.cont [10/16] 0, 128
    %659 = vxpose.xlu0.b32.cont [11/16] 0, 128
    %660 = vxpose.xlu0.b32.cont [12/16] 0, 128
    %661 = vxpose.xlu0.b32.cont [13/16] 0, 128
    %662 = vxpose.xlu0.b32.cont [14/16] 0, 128
    %663 = vxpose.xlu0.b32.cont [15/16] 0, 128
    %664 = vxpose.xlu0.b32.end [16/16] 0, 128
    %v665 = vpop.trf.xlu0
    %v666 = vpop.trf.xlu0
    %v667 = vpop.trf.xlu0
    %v668 = vpop.trf.xlu0
    %v669 = vpop.trf.xlu0
    %v670 = vpop.trf.xlu0
    %v671 = vpop.trf.xlu0
    %v672 = vpop.trf.xlu0
    %v673 = vpop.trf.xlu0
    %v674 = vpop.trf.xlu0
    %v675 = vpop.trf.xlu0
    %v676 = vpop.trf.xlu0
    %v677 = vpop.trf.xlu0
    %v678 = vpop.trf.xlu0
    %v679 = vpop.trf.xlu0
    %v680 = vpop.trf.xlu0
    %681 = vxpose.xlu0.b32.start [1/16] %v575, 128
    %682 = vxpose.xlu0.b32.cont [2/16] 0, 128
    %683 = vxpose.xlu0.b32.cont [3/16] 0, 128
    %684 = vxpose.xlu0.b32.cont [4/16] 0, 128
    %685 = vxpose.xlu0.b32.cont [5/16] 0, 128
    %686 = vxpose.xlu0.b32.cont [6/16] 0, 128
    %687 = vxpose.xlu0.b32.cont [7/16] 0, 128
    %688 = vxpose.xlu0.b32.cont [8/16] 0, 128
    %689 = vxpose.xlu0.b32.cont [9/16] 0, 128
    %690 = vxpose.xlu0.b32.cont [10/16] 0, 128
    %691 = vxpose.xlu0.b32.cont [11/16] 0, 128
    %692 = vxpose.xlu0.b32.cont [12/16] 0, 128
    %693 = vxpose.xlu0.b32.cont [13/16] 0, 128
    %694 = vxpose.xlu0.b32.cont [14/16] 0, 128
    %695 = vxpose.xlu0.b32.cont [15/16] 0, 128
    %696 = vxpose.xlu0.b32.end [16/16] 0, 128
    %v697 = vpop.trf.xlu0
    %v698 = vpop.trf.xlu0
    %v699 = vpop.trf.xlu0
    %v700 = vpop.trf.xlu0
    %v701 = vpop.trf.xlu0
    %v702 = vpop.trf.xlu0
    %v703 = vpop.trf.xlu0
    %v704 = vpop.trf.xlu0
    %v705 = vpop.trf.xlu0
    %v706 = vpop.trf.xlu0
    %v707 = vpop.trf.xlu0
    %v708 = vpop.trf.xlu0
    %v709 = vpop.trf.xlu0
    %v710 = vpop.trf.xlu0
    %v711 = vpop.trf.xlu0
    %v712 = vpop.trf.xlu0
    %713 = vxpose.xlu0.b32.start [1/16] %v579, 128
    %714 = vxpose.xlu0.b32.cont [2/16] 0, 128
    %715 = vxpose.xlu0.b32.cont [3/16] 0, 128
    %716 = vxpose.xlu0.b32.cont [4/16] 0, 128
    %717 = vxpose.xlu0.b32.cont [5/16] 0, 128
    %718 = vxpose.xlu0.b32.cont [6/16] 0, 128
    %719 = vxpose.xlu0.b32.cont [7/16] 0, 128
    %720 = vxpose.xlu0.b32.cont [8/16] 0, 128
    %721 = vxpose.xlu0.b32.cont [9/16] 0, 128
    %722 = vxpose.xlu0.b32.cont [10/16] 0, 128
    %723 = vxpose.xlu0.b32.cont [11/16] 0, 128
    %724 = vxpose.xlu0.b32.cont [12/16] 0, 128
    %725 = vxpose.xlu0.b32.cont [13/16] 0, 128
    %726 = vxpose.xlu0.b32.cont [14/16] 0, 128
    %727 = vxpose.xlu0.b32.cont [15/16] 0, 128
    %728 = vxpose.xlu0.b32.end [16/16] 0, 128
    %v729 = vpop.trf.xlu0
    %v730 = vpop.trf.xlu0
    %v731 = vpop.trf.xlu0
    %v732 = vpop.trf.xlu0
    %v733 = vpop.trf.xlu0
    %v734 = vpop.trf.xlu0
    %v735 = vpop.trf.xlu0
    %v736 = vpop.trf.xlu0
    %v737 = vpop.trf.xlu0
    %v738 = vpop.trf.xlu0
    %v739 = vpop.trf.xlu0
    %v740 = vpop.trf.xlu0
    %v741 = vpop.trf.xlu0
    %v742 = vpop.trf.xlu0
    %v743 = vpop.trf.xlu0
    %v744 = vpop.trf.xlu0
    %745 = vset.pattern.permute.xlu0 0
    %746 = vperm.xlu0 %745, %v633
    %v747 = vpop.permute.xlu0 %746
    %vm748 = vcmp.le.s32.totalorder %v747, %v28
    %vm749 = vcmp.le.s32.totalorder %v747, %v29
    %vm750 = vcmp.le.s32.totalorder %v747, %v30
    %vm751 = vcmp.le.s32.totalorder %v747, %v31
    %v752 = vsel %vm748, 1, 0
    %v753 = vsel %vm749, 1, 0
    %v754 = vsel %vm750, 1, 0
    %v755 = vsel %vm751, 1, 0
    %756 = vset.pattern.permute.xlu0 0
    %757 = vperm.xlu0 %756, %v634
    %v758 = vpop.permute.xlu0 %757
    %vm759 = vcmp.le.s32.totalorder %v758, %v28
    %vm760 = vcmp.le.s32.totalorder %v758, %v29
    %vm761 = vcmp.le.s32.totalorder %v758, %v30
    %vm762 = vcmp.le.s32.totalorder %v758, %v31
    %v763 = vsel %vm759, 1, 0
    %v764 = vsel %vm760, 1, 0
    %v765 = vsel %vm761, 1, 0
    %v766 = vsel %vm762, 1, 0
    %v767 = vadd.s32 %v752, %v763
    %v768 = vadd.s32 %v753, %v764
    %v769 = vadd.s32 %v754, %v765
    %v770 = vadd.s32 %v755, %v766
    %771 = vset.pattern.permute.xlu0 0
    %772 = vperm.xlu0 %771, %v635
    %v773 = vpop.permute.xlu0 %772
    %vm774 = vcmp.le.s32.totalorder %v773, %v28
    %vm775 = vcmp.le.s32.totalorder %v773, %v29
    %vm776 = vcmp.le.s32.totalorder %v773, %v30
    %vm777 = vcmp.le.s32.totalorder %v773, %v31
    %v778 = vsel %vm774, 1, 0
    %v779 = vsel %vm775, 1, 0
    %v780 = vsel %vm776, 1, 0
    %v781 = vsel %vm777, 1, 0
    %v782 = vadd.s32 %v767, %v778
    %v783 = vadd.s32 %v768, %v779
    %v784 = vadd.s32 %v769, %v780
    %v785 = vadd.s32 %v770, %v781
    %786 = vset.pattern.permute.xlu0 0
    %787 = vperm.xlu0 %786, %v636
    %v788 = vpop.permute.xlu0 %787
    %vm789 = vcmp.le.s32.totalorder %v788, %v28
    %vm790 = vcmp.le.s32.totalorder %v788, %v29
    %vm791 = vcmp.le.s32.totalorder %v788, %v30
    %vm792 = vcmp.le.s32.totalorder %v788, %v31
    %v793 = vsel %vm789, 1, 0
    %v794 = vsel %vm790, 1, 0
    %v795 = vsel %vm791, 1, 0
    %v796 = vsel %vm792, 1, 0
    %v797 = vadd.s32 %v782, %v793
    %v798 = vadd.s32 %v783, %v794
    %v799 = vadd.s32 %v784, %v795
    %v800 = vadd.s32 %v785, %v796
    %801 = vset.pattern.permute.xlu0 0
    %802 = vperm.xlu0 %801, %v637
    %v803 = vpop.permute.xlu0 %802
    %vm804 = vcmp.le.s32.totalorder %v803, %v28
    %vm805 = vcmp.le.s32.totalorder %v803, %v29
    %vm806 = vcmp.le.s32.totalorder %v803, %v30
    %vm807 = vcmp.le.s32.totalorder %v803, %v31
    %v808 = vsel %vm804, 1, 0
    %v809 = vsel %vm805, 1, 0
    %v810 = vsel %vm806, 1, 0
    %v811 = vsel %vm807, 1, 0
    %v812 = vadd.s32 %v797, %v808
    %v813 = vadd.s32 %v798, %v809
    %v814 = vadd.s32 %v799, %v810
    %v815 = vadd.s32 %v800, %v811
    %816 = vset.pattern.permute.xlu0 0
    %817 = vperm.xlu0 %816, %v638
    %v818 = vpop.permute.xlu0 %817
    %vm819 = vcmp.le.s32.totalorder %v818, %v28
    %vm820 = vcmp.le.s32.totalorder %v818, %v29
    %vm821 = vcmp.le.s32.totalorder %v818, %v30
    %vm822 = vcmp.le.s32.totalorder %v818, %v31
    %v823 = vsel %vm819, 1, 0
    %v824 = vsel %vm820, 1, 0
    %v825 = vsel %vm821, 1, 0
    %v826 = vsel %vm822, 1, 0
    %v827 = vadd.s32 %v812, %v823
    %v828 = vadd.s32 %v813, %v824
    %v829 = vadd.s32 %v814, %v825
    %v830 = vadd.s32 %v815, %v826
    %831 = vset.pattern.permute.xlu0 0
    %832 = vperm.xlu0 %831, %v639
    %v833 = vpop.permute.xlu0 %832
    %vm834 = vcmp.le.s32.totalorder %v833, %v28
    %vm835 = vcmp.le.s32.totalorder %v833, %v29
    %vm836 = vcmp.le.s32.totalorder %v833, %v30
    %vm837 = vcmp.le.s32.totalorder %v833, %v31
    %v838 = vsel %vm834, 1, 0
    %v839 = vsel %vm835, 1, 0
    %v840 = vsel %vm836, 1, 0
    %v841 = vsel %vm837, 1, 0
    %v842 = vadd.s32 %v827, %v838
    %v843 = vadd.s32 %v828, %v839
    %v844 = vadd.s32 %v829, %v840
    %v845 = vadd.s32 %v830, %v841
    %846 = vset.pattern.permute.xlu0 0
    %847 = vperm.xlu0 %846, %v640
    %v848 = vpop.permute.xlu0 %847
    %vm849 = vcmp.le.s32.totalorder %v848, %v28
    %vm850 = vcmp.le.s32.totalorder %v848, %v29
    %vm851 = vcmp.le.s32.totalorder %v848, %v30
    %vm852 = vcmp.le.s32.totalorder %v848, %v31
    %v853 = vsel %vm849, 1, 0
    %v854 = vsel %vm850, 1, 0
    %v855 = vsel %vm851, 1, 0
    %v856 = vsel %vm852, 1, 0
    %v857 = vadd.s32 %v842, %v853
    %v858 = vadd.s32 %v843, %v854
    %v859 = vadd.s32 %v844, %v855
    %v860 = vadd.s32 %v845, %v856
    %861 = vset.pattern.permute.xlu0 0
    %862 = vperm.xlu0 %861, %v641
    %v863 = vpop.permute.xlu0 %862
    %vm864 = vcmp.le.s32.totalorder %v863, %v28
    %vm865 = vcmp.le.s32.totalorder %v863, %v29
    %vm866 = vcmp.le.s32.totalorder %v863, %v30
    %vm867 = vcmp.le.s32.totalorder %v863, %v31
    %v868 = vsel %vm864, 1, 0
    %v869 = vsel %vm865, 1, 0
    %v870 = vsel %vm866, 1, 0
    %v871 = vsel %vm867, 1, 0
    %v872 = vadd.s32 %v857, %v868
    %v873 = vadd.s32 %v858, %v869
    %v874 = vadd.s32 %v859, %v870
    %v875 = vadd.s32 %v860, %v871
    %876 = vset.pattern.permute.xlu0 0
    %877 = vperm.xlu0 %876, %v642
    %v878 = vpop.permute.xlu0 %877
    %vm879 = vcmp.le.s32.totalorder %v878, %v28
    %vm880 = vcmp.le.s32.totalorder %v878, %v29
    %vm881 = vcmp.le.s32.totalorder %v878, %v30
    %vm882 = vcmp.le.s32.totalorder %v878, %v31
    %v883 = vsel %vm879, 1, 0
    %v884 = vsel %vm880, 1, 0
    %v885 = vsel %vm881, 1, 0
    %v886 = vsel %vm882, 1, 0
    %v887 = vadd.s32 %v872, %v883
    %v888 = vadd.s32 %v873, %v884
    %v889 = vadd.s32 %v874, %v885
    %v890 = vadd.s32 %v875, %v886
    %891 = vset.pattern.permute.xlu0 0
    %892 = vperm.xlu0 %891, %v643
    %v893 = vpop.permute.xlu0 %892
    %vm894 = vcmp.le.s32.totalorder %v893, %v28
    %vm895 = vcmp.le.s32.totalorder %v893, %v29
    %vm896 = vcmp.le.s32.totalorder %v893, %v30
    %vm897 = vcmp.le.s32.totalorder %v893, %v31
    %v898 = vsel %vm894, 1, 0
    %v899 = vsel %vm895, 1, 0
    %v900 = vsel %vm896, 1, 0
    %v901 = vsel %vm897, 1, 0
    %v902 = vadd.s32 %v887, %v898
    %v903 = vadd.s32 %v888, %v899
    %v904 = vadd.s32 %v889, %v900
    %v905 = vadd.s32 %v890, %v901
    %906 = vset.pattern.permute.xlu0 0
    %907 = vperm.xlu0 %906, %v644
    %v908 = vpop.permute.xlu0 %907
    %vm909 = vcmp.le.s32.totalorder %v908, %v28
    %vm910 = vcmp.le.s32.totalorder %v908, %v29
    %vm911 = vcmp.le.s32.totalorder %v908, %v30
    %vm912 = vcmp.le.s32.totalorder %v908, %v31
    %v913 = vsel %vm909, 1, 0
    %v914 = vsel %vm910, 1, 0
    %v915 = vsel %vm911, 1, 0
    %v916 = vsel %vm912, 1, 0
    %v917 = vadd.s32 %v902, %v913
    %v918 = vadd.s32 %v903, %v914
    %v919 = vadd.s32 %v904, %v915
    %v920 = vadd.s32 %v905, %v916
    %921 = vset.pattern.permute.xlu0 0
    %922 = vperm.xlu0 %921, %v645
    %v923 = vpop.permute.xlu0 %922
    %vm924 = vcmp.le.s32.totalorder %v923, %v28
    %vm925 = vcmp.le.s32.totalorder %v923, %v29
    %vm926 = vcmp.le.s32.totalorder %v923, %v30
    %vm927 = vcmp.le.s32.totalorder %v923, %v31
    %v928 = vsel %vm924, 1, 0
    %v929 = vsel %vm925, 1, 0
    %v930 = vsel %vm926, 1, 0
    %v931 = vsel %vm927, 1, 0
    %v932 = vadd.s32 %v917, %v928
    %v933 = vadd.s32 %v918, %v929
    %v934 = vadd.s32 %v919, %v930
    %v935 = vadd.s32 %v920, %v931
    %936 = vset.pattern.permute.xlu0 0
    %937 = vperm.xlu0 %936, %v646
    %v938 = vpop.permute.xlu0 %937
    %vm939 = vcmp.le.s32.totalorder %v938, %v28
    %vm940 = vcmp.le.s32.totalorder %v938, %v29
    %vm941 = vcmp.le.s32.totalorder %v938, %v30
    %vm942 = vcmp.le.s32.totalorder %v938, %v31
    %v943 = vsel %vm939, 1, 0
    %v944 = vsel %vm940, 1, 0
    %v945 = vsel %vm941, 1, 0
    %v946 = vsel %vm942, 1, 0
    %v947 = vadd.s32 %v932, %v943
    %v948 = vadd.s32 %v933, %v944
    %v949 = vadd.s32 %v934, %v945
    %v950 = vadd.s32 %v935, %v946
    %951 = vset.pattern.permute.xlu0 0
    %952 = vperm.xlu0 %951, %v647
    %v953 = vpop.permute.xlu0 %952
    %vm954 = vcmp.le.s32.totalorder %v953, %v28
    %vm955 = vcmp.le.s32.totalorder %v953, %v29
    %vm956 = vcmp.le.s32.totalorder %v953, %v30
    %vm957 = vcmp.le.s32.totalorder %v953, %v31
    %v958 = vsel %vm954, 1, 0
    %v959 = vsel %vm955, 1, 0
    %v960 = vsel %vm956, 1, 0
    %v961 = vsel %vm957, 1, 0
    %v962 = vadd.s32 %v947, %v958
    %v963 = vadd.s32 %v948, %v959
    %v964 = vadd.s32 %v949, %v960
    %v965 = vadd.s32 %v950, %v961
    %966 = vset.pattern.permute.xlu0 0
    %967 = vperm.xlu0 %966, %v648
    %v968 = vpop.permute.xlu0 %967
    %vm969 = vcmp.le.s32.totalorder %v968, %v28
    %vm970 = vcmp.le.s32.totalorder %v968, %v29
    %vm971 = vcmp.le.s32.totalorder %v968, %v30
    %vm972 = vcmp.le.s32.totalorder %v968, %v31
    %v973 = vsel %vm969, 1, 0
    %v974 = vsel %vm970, 1, 0
    %v975 = vsel %vm971, 1, 0
    %v976 = vsel %vm972, 1, 0
    %v977 = vadd.s32 %v962, %v973
    %v978 = vadd.s32 %v963, %v974
    %v979 = vadd.s32 %v964, %v975
    %v980 = vadd.s32 %v965, %v976
    %981 = vset.pattern.permute.xlu0 0
    %982 = vperm.xlu0 %981, %v665
    %v983 = vpop.permute.xlu0 %982
    %vm984 = vcmp.le.s32.totalorder %v983, %v28
    %vm985 = vcmp.le.s32.totalorder %v983, %v29
    %vm986 = vcmp.le.s32.totalorder %v983, %v30
    %vm987 = vcmp.le.s32.totalorder %v983, %v31
    %v988 = vsel %vm984, 1, 0
    %v989 = vsel %vm985, 1, 0
    %v990 = vsel %vm986, 1, 0
    %v991 = vsel %vm987, 1, 0
    %v992 = vadd.s32 %v977, %v988
    %v993 = vadd.s32 %v978, %v989
    %v994 = vadd.s32 %v979, %v990
    %v995 = vadd.s32 %v980, %v991
    %996 = vset.pattern.permute.xlu0 0
    %997 = vperm.xlu0 %996, %v666
    %v998 = vpop.permute.xlu0 %997
    %vm999 = vcmp.le.s32.totalorder %v998, %v28
    %vm1000 = vcmp.le.s32.totalorder %v998, %v29
    %vm1001 = vcmp.le.s32.totalorder %v998, %v30
    %vm1002 = vcmp.le.s32.totalorder %v998, %v31
    %v1003 = vsel %vm999, 1, 0
    %v1004 = vsel %vm1000, 1, 0
    %v1005 = vsel %vm1001, 1, 0
    %v1006 = vsel %vm1002, 1, 0
    %v1007 = vadd.s32 %v992, %v1003
    %v1008 = vadd.s32 %v993, %v1004
    %v1009 = vadd.s32 %v994, %v1005
    %v1010 = vadd.s32 %v995, %v1006
    %1011 = vset.pattern.permute.xlu0 0
    %1012 = vperm.xlu0 %1011, %v667
    %v1013 = vpop.permute.xlu0 %1012
    %vm1014 = vcmp.le.s32.totalorder %v1013, %v28
    %vm1015 = vcmp.le.s32.totalorder %v1013, %v29
    %vm1016 = vcmp.le.s32.totalorder %v1013, %v30
    %vm1017 = vcmp.le.s32.totalorder %v1013, %v31
    %v1018 = vsel %vm1014, 1, 0
    %v1019 = vsel %vm1015, 1, 0
    %v1020 = vsel %vm1016, 1, 0
    %v1021 = vsel %vm1017, 1, 0
    %v1022 = vadd.s32 %v1007, %v1018
    %v1023 = vadd.s32 %v1008, %v1019
    %v1024 = vadd.s32 %v1009, %v1020
    %v1025 = vadd.s32 %v1010, %v1021
    %1026 = vset.pattern.permute.xlu0 0
    %1027 = vperm.xlu0 %1026, %v668
    %v1028 = vpop.permute.xlu0 %1027
    %vm1029 = vcmp.le.s32.totalorder %v1028, %v28
    %vm1030 = vcmp.le.s32.totalorder %v1028, %v29
    %vm1031 = vcmp.le.s32.totalorder %v1028, %v30
    %vm1032 = vcmp.le.s32.totalorder %v1028, %v31
    %v1033 = vsel %vm1029, 1, 0
    %v1034 = vsel %vm1030, 1, 0
    %v1035 = vsel %vm1031, 1, 0
    %v1036 = vsel %vm1032, 1, 0
    %v1037 = vadd.s32 %v1022, %v1033
    %v1038 = vadd.s32 %v1023, %v1034
    %v1039 = vadd.s32 %v1024, %v1035
    %v1040 = vadd.s32 %v1025, %v1036
    %1041 = vset.pattern.permute.xlu0 0
    %1042 = vperm.xlu0 %1041, %v669
    %v1043 = vpop.permute.xlu0 %1042
    %vm1044 = vcmp.le.s32.totalorder %v1043, %v28
    %vm1045 = vcmp.le.s32.totalorder %v1043, %v29
    %vm1046 = vcmp.le.s32.totalorder %v1043, %v30
    %vm1047 = vcmp.le.s32.totalorder %v1043, %v31
    %v1048 = vsel %vm1044, 1, 0
    %v1049 = vsel %vm1045, 1, 0
    %v1050 = vsel %vm1046, 1, 0
    %v1051 = vsel %vm1047, 1, 0
    %v1052 = vadd.s32 %v1037, %v1048
    %v1053 = vadd.s32 %v1038, %v1049
    %v1054 = vadd.s32 %v1039, %v1050
    %v1055 = vadd.s32 %v1040, %v1051
    %1056 = vset.pattern.permute.xlu0 0
    %1057 = vperm.xlu0 %1056, %v670
    %v1058 = vpop.permute.xlu0 %1057
    %vm1059 = vcmp.le.s32.totalorder %v1058, %v28
    %vm1060 = vcmp.le.s32.totalorder %v1058, %v29
    %vm1061 = vcmp.le.s32.totalorder %v1058, %v30
    %vm1062 = vcmp.le.s32.totalorder %v1058, %v31
    %v1063 = vsel %vm1059, 1, 0
    %v1064 = vsel %vm1060, 1, 0
    %v1065 = vsel %vm1061, 1, 0
    %v1066 = vsel %vm1062, 1, 0
    %v1067 = vadd.s32 %v1052, %v1063
    %v1068 = vadd.s32 %v1053, %v1064
    %v1069 = vadd.s32 %v1054, %v1065
    %v1070 = vadd.s32 %v1055, %v1066
    %1071 = vset.pattern.permute.xlu0 0
    %1072 = vperm.xlu0 %1071, %v671
    %v1073 = vpop.permute.xlu0 %1072
    %vm1074 = vcmp.le.s32.totalorder %v1073, %v28
    %vm1075 = vcmp.le.s32.totalorder %v1073, %v29
    %vm1076 = vcmp.le.s32.totalorder %v1073, %v30
    %vm1077 = vcmp.le.s32.totalorder %v1073, %v31
    %v1078 = vsel %vm1074, 1, 0
    %v1079 = vsel %vm1075, 1, 0
    %v1080 = vsel %vm1076, 1, 0
    %v1081 = vsel %vm1077, 1, 0
    %v1082 = vadd.s32 %v1067, %v1078
    %v1083 = vadd.s32 %v1068, %v1079
    %v1084 = vadd.s32 %v1069, %v1080
    %v1085 = vadd.s32 %v1070, %v1081
    %1086 = vset.pattern.permute.xlu0 0
    %1087 = vperm.xlu0 %1086, %v672
    %v1088 = vpop.permute.xlu0 %1087
    %vm1089 = vcmp.le.s32.totalorder %v1088, %v28
    %vm1090 = vcmp.le.s32.totalorder %v1088, %v29
    %vm1091 = vcmp.le.s32.totalorder %v1088, %v30
    %vm1092 = vcmp.le.s32.totalorder %v1088, %v31
    %v1093 = vsel %vm1089, 1, 0
    %v1094 = vsel %vm1090, 1, 0
    %v1095 = vsel %vm1091, 1, 0
    %v1096 = vsel %vm1092, 1, 0
    %v1097 = vadd.s32 %v1082, %v1093
    %v1098 = vadd.s32 %v1083, %v1094
    %v1099 = vadd.s32 %v1084, %v1095
    %v1100 = vadd.s32 %v1085, %v1096
    %1101 = vset.pattern.permute.xlu0 0
    %1102 = vperm.xlu0 %1101, %v673
    %v1103 = vpop.permute.xlu0 %1102
    %vm1104 = vcmp.le.s32.totalorder %v1103, %v28
    %vm1105 = vcmp.le.s32.totalorder %v1103, %v29
    %vm1106 = vcmp.le.s32.totalorder %v1103, %v30
    %vm1107 = vcmp.le.s32.totalorder %v1103, %v31
    %v1108 = vsel %vm1104, 1, 0
    %v1109 = vsel %vm1105, 1, 0
    %v1110 = vsel %vm1106, 1, 0
    %v1111 = vsel %vm1107, 1, 0
    %v1112 = vadd.s32 %v1097, %v1108
    %v1113 = vadd.s32 %v1098, %v1109
    %v1114 = vadd.s32 %v1099, %v1110
    %v1115 = vadd.s32 %v1100, %v1111
    %1116 = vset.pattern.permute.xlu0 0
    %1117 = vperm.xlu0 %1116, %v674
    %v1118 = vpop.permute.xlu0 %1117
    %vm1119 = vcmp.le.s32.totalorder %v1118, %v28
    %vm1120 = vcmp.le.s32.totalorder %v1118, %v29
    %vm1121 = vcmp.le.s32.totalorder %v1118, %v30
    %vm1122 = vcmp.le.s32.totalorder %v1118, %v31
    %v1123 = vsel %vm1119, 1, 0
    %v1124 = vsel %vm1120, 1, 0
    %v1125 = vsel %vm1121, 1, 0
    %v1126 = vsel %vm1122, 1, 0
    %v1127 = vadd.s32 %v1112, %v1123
    %v1128 = vadd.s32 %v1113, %v1124
    %v1129 = vadd.s32 %v1114, %v1125
    %v1130 = vadd.s32 %v1115, %v1126
    %1131 = vset.pattern.permute.xlu0 0
    %1132 = vperm.xlu0 %1131, %v675
    %v1133 = vpop.permute.xlu0 %1132
    %vm1134 = vcmp.le.s32.totalorder %v1133, %v28
    %vm1135 = vcmp.le.s32.totalorder %v1133, %v29
    %vm1136 = vcmp.le.s32.totalorder %v1133, %v30
    %vm1137 = vcmp.le.s32.totalorder %v1133, %v31
    %v1138 = vsel %vm1134, 1, 0
    %v1139 = vsel %vm1135, 1, 0
    %v1140 = vsel %vm1136, 1, 0
    %v1141 = vsel %vm1137, 1, 0
    %v1142 = vadd.s32 %v1127, %v1138
    %v1143 = vadd.s32 %v1128, %v1139
    %v1144 = vadd.s32 %v1129, %v1140
    %v1145 = vadd.s32 %v1130, %v1141
    %1146 = vset.pattern.permute.xlu0 0
    %1147 = vperm.xlu0 %1146, %v676
    %v1148 = vpop.permute.xlu0 %1147
    %vm1149 = vcmp.le.s32.totalorder %v1148, %v28
    %vm1150 = vcmp.le.s32.totalorder %v1148, %v29
    %vm1151 = vcmp.le.s32.totalorder %v1148, %v30
    %vm1152 = vcmp.le.s32.totalorder %v1148, %v31
    %v1153 = vsel %vm1149, 1, 0
    %v1154 = vsel %vm1150, 1, 0
    %v1155 = vsel %vm1151, 1, 0
    %v1156 = vsel %vm1152, 1, 0
    %v1157 = vadd.s32 %v1142, %v1153
    %v1158 = vadd.s32 %v1143, %v1154
    %v1159 = vadd.s32 %v1144, %v1155
    %v1160 = vadd.s32 %v1145, %v1156
    %1161 = vset.pattern.permute.xlu0 0
    %1162 = vperm.xlu0 %1161, %v677
    %v1163 = vpop.permute.xlu0 %1162
    %vm1164 = vcmp.le.s32.totalorder %v1163, %v28
    %vm1165 = vcmp.le.s32.totalorder %v1163, %v29
    %vm1166 = vcmp.le.s32.totalorder %v1163, %v30
    %vm1167 = vcmp.le.s32.totalorder %v1163, %v31
    %v1168 = vsel %vm1164, 1, 0
    %v1169 = vsel %vm1165, 1, 0
    %v1170 = vsel %vm1166, 1, 0
    %v1171 = vsel %vm1167, 1, 0
    %v1172 = vadd.s32 %v1157, %v1168
    %v1173 = vadd.s32 %v1158, %v1169
    %v1174 = vadd.s32 %v1159, %v1170
    %v1175 = vadd.s32 %v1160, %v1171
    %1176 = vset.pattern.permute.xlu0 0
    %1177 = vperm.xlu0 %1176, %v678
    %v1178 = vpop.permute.xlu0 %1177
    %vm1179 = vcmp.le.s32.totalorder %v1178, %v28
    %vm1180 = vcmp.le.s32.totalorder %v1178, %v29
    %vm1181 = vcmp.le.s32.totalorder %v1178, %v30
    %vm1182 = vcmp.le.s32.totalorder %v1178, %v31
    %v1183 = vsel %vm1179, 1, 0
    %v1184 = vsel %vm1180, 1, 0
    %v1185 = vsel %vm1181, 1, 0
    %v1186 = vsel %vm1182, 1, 0
    %v1187 = vadd.s32 %v1172, %v1183
    %v1188 = vadd.s32 %v1173, %v1184
    %v1189 = vadd.s32 %v1174, %v1185
    %v1190 = vadd.s32 %v1175, %v1186
    %1191 = vset.pattern.permute.xlu0 0
    %1192 = vperm.xlu0 %1191, %v679
    %v1193 = vpop.permute.xlu0 %1192
    %vm1194 = vcmp.le.s32.totalorder %v1193, %v28
    %vm1195 = vcmp.le.s32.totalorder %v1193, %v29
    %vm1196 = vcmp.le.s32.totalorder %v1193, %v30
    %vm1197 = vcmp.le.s32.totalorder %v1193, %v31
    %v1198 = vsel %vm1194, 1, 0
    %v1199 = vsel %vm1195, 1, 0
    %v1200 = vsel %vm1196, 1, 0
    %v1201 = vsel %vm1197, 1, 0
    %v1202 = vadd.s32 %v1187, %v1198
    %v1203 = vadd.s32 %v1188, %v1199
    %v1204 = vadd.s32 %v1189, %v1200
    %v1205 = vadd.s32 %v1190, %v1201
    %1206 = vset.pattern.permute.xlu0 0
    %1207 = vperm.xlu0 %1206, %v680
    %v1208 = vpop.permute.xlu0 %1207
    %vm1209 = vcmp.le.s32.totalorder %v1208, %v28
    %vm1210 = vcmp.le.s32.totalorder %v1208, %v29
    %vm1211 = vcmp.le.s32.totalorder %v1208, %v30
    %vm1212 = vcmp.le.s32.totalorder %v1208, %v31
    %v1213 = vsel %vm1209, 1, 0
    %v1214 = vsel %vm1210, 1, 0
    %v1215 = vsel %vm1211, 1, 0
    %v1216 = vsel %vm1212, 1, 0
    %v1217 = vadd.s32 %v1202, %v1213
    %v1218 = vadd.s32 %v1203, %v1214
    %v1219 = vadd.s32 %v1204, %v1215
    %v1220 = vadd.s32 %v1205, %v1216
    %1221 = vset.pattern.permute.xlu0 0
    %1222 = vperm.xlu0 %1221, %v697
    %v1223 = vpop.permute.xlu0 %1222
    %vm1224 = vcmp.le.s32.totalorder %v1223, %v28
    %vm1225 = vcmp.le.s32.totalorder %v1223, %v29
    %vm1226 = vcmp.le.s32.totalorder %v1223, %v30
    %vm1227 = vcmp.le.s32.totalorder %v1223, %v31
    %v1228 = vsel %vm1224, 1, 0
    %v1229 = vsel %vm1225, 1, 0
    %v1230 = vsel %vm1226, 1, 0
    %v1231 = vsel %vm1227, 1, 0
    %v1232 = vadd.s32 %v1217, %v1228
    %v1233 = vadd.s32 %v1218, %v1229
    %v1234 = vadd.s32 %v1219, %v1230
    %v1235 = vadd.s32 %v1220, %v1231
    %1236 = vset.pattern.permute.xlu0 0
    %1237 = vperm.xlu0 %1236, %v698
    %v1238 = vpop.permute.xlu0 %1237
    %vm1239 = vcmp.le.s32.totalorder %v1238, %v28
    %vm1240 = vcmp.le.s32.totalorder %v1238, %v29
    %vm1241 = vcmp.le.s32.totalorder %v1238, %v30
    %vm1242 = vcmp.le.s32.totalorder %v1238, %v31
    %v1243 = vsel %vm1239, 1, 0
    %v1244 = vsel %vm1240, 1, 0
    %v1245 = vsel %vm1241, 1, 0
    %v1246 = vsel %vm1242, 1, 0
    %v1247 = vadd.s32 %v1232, %v1243
    %v1248 = vadd.s32 %v1233, %v1244
    %v1249 = vadd.s32 %v1234, %v1245
    %v1250 = vadd.s32 %v1235, %v1246
    %1251 = vset.pattern.permute.xlu0 0
    %1252 = vperm.xlu0 %1251, %v699
    %v1253 = vpop.permute.xlu0 %1252
    %vm1254 = vcmp.le.s32.totalorder %v1253, %v28
    %vm1255 = vcmp.le.s32.totalorder %v1253, %v29
    %vm1256 = vcmp.le.s32.totalorder %v1253, %v30
    %vm1257 = vcmp.le.s32.totalorder %v1253, %v31
    %v1258 = vsel %vm1254, 1, 0
    %v1259 = vsel %vm1255, 1, 0
    %v1260 = vsel %vm1256, 1, 0
    %v1261 = vsel %vm1257, 1, 0
    %v1262 = vadd.s32 %v1247, %v1258
    %v1263 = vadd.s32 %v1248, %v1259
    %v1264 = vadd.s32 %v1249, %v1260
    %v1265 = vadd.s32 %v1250, %v1261
    %1266 = vset.pattern.permute.xlu0 0
    %1267 = vperm.xlu0 %1266, %v700
    %v1268 = vpop.permute.xlu0 %1267
    %vm1269 = vcmp.le.s32.totalorder %v1268, %v28
    %vm1270 = vcmp.le.s32.totalorder %v1268, %v29
    %vm1271 = vcmp.le.s32.totalorder %v1268, %v30
    %vm1272 = vcmp.le.s32.totalorder %v1268, %v31
    %v1273 = vsel %vm1269, 1, 0
    %v1274 = vsel %vm1270, 1, 0
    %v1275 = vsel %vm1271, 1, 0
    %v1276 = vsel %vm1272, 1, 0
    %v1277 = vadd.s32 %v1262, %v1273
    %v1278 = vadd.s32 %v1263, %v1274
    %v1279 = vadd.s32 %v1264, %v1275
    %v1280 = vadd.s32 %v1265, %v1276
    %1281 = vset.pattern.permute.xlu0 0
    %1282 = vperm.xlu0 %1281, %v701
    %v1283 = vpop.permute.xlu0 %1282
    %vm1284 = vcmp.le.s32.totalorder %v1283, %v28
    %vm1285 = vcmp.le.s32.totalorder %v1283, %v29
    %vm1286 = vcmp.le.s32.totalorder %v1283, %v30
    %vm1287 = vcmp.le.s32.totalorder %v1283, %v31
    %v1288 = vsel %vm1284, 1, 0
    %v1289 = vsel %vm1285, 1, 0
    %v1290 = vsel %vm1286, 1, 0
    %v1291 = vsel %vm1287, 1, 0
    %v1292 = vadd.s32 %v1277, %v1288
    %v1293 = vadd.s32 %v1278, %v1289
    %v1294 = vadd.s32 %v1279, %v1290
    %v1295 = vadd.s32 %v1280, %v1291
    %1296 = vset.pattern.permute.xlu0 0
    %1297 = vperm.xlu0 %1296, %v702
    %v1298 = vpop.permute.xlu0 %1297
    %vm1299 = vcmp.le.s32.totalorder %v1298, %v28
    %vm1300 = vcmp.le.s32.totalorder %v1298, %v29
    %vm1301 = vcmp.le.s32.totalorder %v1298, %v30
    %vm1302 = vcmp.le.s32.totalorder %v1298, %v31
    %v1303 = vsel %vm1299, 1, 0
    %v1304 = vsel %vm1300, 1, 0
    %v1305 = vsel %vm1301, 1, 0
    %v1306 = vsel %vm1302, 1, 0
    %v1307 = vadd.s32 %v1292, %v1303
    %v1308 = vadd.s32 %v1293, %v1304
    %v1309 = vadd.s32 %v1294, %v1305
    %v1310 = vadd.s32 %v1295, %v1306
    %1311 = vset.pattern.permute.xlu0 0
    %1312 = vperm.xlu0 %1311, %v703
    %v1313 = vpop.permute.xlu0 %1312
    %vm1314 = vcmp.le.s32.totalorder %v1313, %v28
    %vm1315 = vcmp.le.s32.totalorder %v1313, %v29
    %vm1316 = vcmp.le.s32.totalorder %v1313, %v30
    %vm1317 = vcmp.le.s32.totalorder %v1313, %v31
    %v1318 = vsel %vm1314, 1, 0
    %v1319 = vsel %vm1315, 1, 0
    %v1320 = vsel %vm1316, 1, 0
    %v1321 = vsel %vm1317, 1, 0
    %v1322 = vadd.s32 %v1307, %v1318
    %v1323 = vadd.s32 %v1308, %v1319
    %v1324 = vadd.s32 %v1309, %v1320
    %v1325 = vadd.s32 %v1310, %v1321
    %1326 = vset.pattern.permute.xlu0 0
    %1327 = vperm.xlu0 %1326, %v704
    %v1328 = vpop.permute.xlu0 %1327
    %vm1329 = vcmp.le.s32.totalorder %v1328, %v28
    %vm1330 = vcmp.le.s32.totalorder %v1328, %v29
    %vm1331 = vcmp.le.s32.totalorder %v1328, %v30
    %vm1332 = vcmp.le.s32.totalorder %v1328, %v31
    %v1333 = vsel %vm1329, 1, 0
    %v1334 = vsel %vm1330, 1, 0
    %v1335 = vsel %vm1331, 1, 0
    %v1336 = vsel %vm1332, 1, 0
    %v1337 = vadd.s32 %v1322, %v1333
    %v1338 = vadd.s32 %v1323, %v1334
    %v1339 = vadd.s32 %v1324, %v1335
    %v1340 = vadd.s32 %v1325, %v1336
    %1341 = vset.pattern.permute.xlu0 0
    %1342 = vperm.xlu0 %1341, %v705
    %v1343 = vpop.permute.xlu0 %1342
    %vm1344 = vcmp.le.s32.totalorder %v1343, %v28
    %vm1345 = vcmp.le.s32.totalorder %v1343, %v29
    %vm1346 = vcmp.le.s32.totalorder %v1343, %v30
    %vm1347 = vcmp.le.s32.totalorder %v1343, %v31
    %v1348 = vsel %vm1344, 1, 0
    %v1349 = vsel %vm1345, 1, 0
    %v1350 = vsel %vm1346, 1, 0
    %v1351 = vsel %vm1347, 1, 0
    %v1352 = vadd.s32 %v1337, %v1348
    %v1353 = vadd.s32 %v1338, %v1349
    %v1354 = vadd.s32 %v1339, %v1350
    %v1355 = vadd.s32 %v1340, %v1351
    %1356 = vset.pattern.permute.xlu0 0
    %1357 = vperm.xlu0 %1356, %v706
    %v1358 = vpop.permute.xlu0 %1357
    %vm1359 = vcmp.le.s32.totalorder %v1358, %v28
    %vm1360 = vcmp.le.s32.totalorder %v1358, %v29
    %vm1361 = vcmp.le.s32.totalorder %v1358, %v30
    %vm1362 = vcmp.le.s32.totalorder %v1358, %v31
    %v1363 = vsel %vm1359, 1, 0
    %v1364 = vsel %vm1360, 1, 0
    %v1365 = vsel %vm1361, 1, 0
    %v1366 = vsel %vm1362, 1, 0
    %v1367 = vadd.s32 %v1352, %v1363
    %v1368 = vadd.s32 %v1353, %v1364
    %v1369 = vadd.s32 %v1354, %v1365
    %v1370 = vadd.s32 %v1355, %v1366
    %1371 = vset.pattern.permute.xlu0 0
    %1372 = vperm.xlu0 %1371, %v707
    %v1373 = vpop.permute.xlu0 %1372
    %vm1374 = vcmp.le.s32.totalorder %v1373, %v28
    %vm1375 = vcmp.le.s32.totalorder %v1373, %v29
    %vm1376 = vcmp.le.s32.totalorder %v1373, %v30
    %vm1377 = vcmp.le.s32.totalorder %v1373, %v31
    %v1378 = vsel %vm1374, 1, 0
    %v1379 = vsel %vm1375, 1, 0
    %v1380 = vsel %vm1376, 1, 0
    %v1381 = vsel %vm1377, 1, 0
    %v1382 = vadd.s32 %v1367, %v1378
    %v1383 = vadd.s32 %v1368, %v1379
    %v1384 = vadd.s32 %v1369, %v1380
    %v1385 = vadd.s32 %v1370, %v1381
    %1386 = vset.pattern.permute.xlu0 0
    %1387 = vperm.xlu0 %1386, %v708
    %v1388 = vpop.permute.xlu0 %1387
    %vm1389 = vcmp.le.s32.totalorder %v1388, %v28
    %vm1390 = vcmp.le.s32.totalorder %v1388, %v29
    %vm1391 = vcmp.le.s32.totalorder %v1388, %v30
    %vm1392 = vcmp.le.s32.totalorder %v1388, %v31
    %v1393 = vsel %vm1389, 1, 0
    %v1394 = vsel %vm1390, 1, 0
    %v1395 = vsel %vm1391, 1, 0
    %v1396 = vsel %vm1392, 1, 0
    %v1397 = vadd.s32 %v1382, %v1393
    %v1398 = vadd.s32 %v1383, %v1394
    %v1399 = vadd.s32 %v1384, %v1395
    %v1400 = vadd.s32 %v1385, %v1396
    %1401 = vset.pattern.permute.xlu0 0
    %1402 = vperm.xlu0 %1401, %v709
    %v1403 = vpop.permute.xlu0 %1402
    %vm1404 = vcmp.le.s32.totalorder %v1403, %v28
    %vm1405 = vcmp.le.s32.totalorder %v1403, %v29
    %vm1406 = vcmp.le.s32.totalorder %v1403, %v30
    %vm1407 = vcmp.le.s32.totalorder %v1403, %v31
    %v1408 = vsel %vm1404, 1, 0
    %v1409 = vsel %vm1405, 1, 0
    %v1410 = vsel %vm1406, 1, 0
    %v1411 = vsel %vm1407, 1, 0
    %v1412 = vadd.s32 %v1397, %v1408
    %v1413 = vadd.s32 %v1398, %v1409
    %v1414 = vadd.s32 %v1399, %v1410
    %v1415 = vadd.s32 %v1400, %v1411
    %1416 = vset.pattern.permute.xlu0 0
    %1417 = vperm.xlu0 %1416, %v710
    %v1418 = vpop.permute.xlu0 %1417
    %vm1419 = vcmp.le.s32.totalorder %v1418, %v28
    %vm1420 = vcmp.le.s32.totalorder %v1418, %v29
    %vm1421 = vcmp.le.s32.totalorder %v1418, %v30
    %vm1422 = vcmp.le.s32.totalorder %v1418, %v31
    %v1423 = vsel %vm1419, 1, 0
    %v1424 = vsel %vm1420, 1, 0
    %v1425 = vsel %vm1421, 1, 0
    %v1426 = vsel %vm1422, 1, 0
    %v1427 = vadd.s32 %v1412, %v1423
    %v1428 = vadd.s32 %v1413, %v1424
    %v1429 = vadd.s32 %v1414, %v1425
    %v1430 = vadd.s32 %v1415, %v1426
    %1431 = vset.pattern.permute.xlu0 0
    %1432 = vperm.xlu0 %1431, %v711
    %v1433 = vpop.permute.xlu0 %1432
    %vm1434 = vcmp.le.s32.totalorder %v1433, %v28
    %vm1435 = vcmp.le.s32.totalorder %v1433, %v29
    %vm1436 = vcmp.le.s32.totalorder %v1433, %v30
    %vm1437 = vcmp.le.s32.totalorder %v1433, %v31
    %v1438 = vsel %vm1434, 1, 0
    %v1439 = vsel %vm1435, 1, 0
    %v1440 = vsel %vm1436, 1, 0
    %v1441 = vsel %vm1437, 1, 0
    %v1442 = vadd.s32 %v1427, %v1438
    %v1443 = vadd.s32 %v1428, %v1439
    %v1444 = vadd.s32 %v1429, %v1440
    %v1445 = vadd.s32 %v1430, %v1441
    %1446 = vset.pattern.permute.xlu0 0
    %1447 = vperm.xlu0 %1446, %v712
    %v1448 = vpop.permute.xlu0 %1447
    %vm1449 = vcmp.le.s32.totalorder %v1448, %v28
    %vm1450 = vcmp.le.s32.totalorder %v1448, %v29
    %vm1451 = vcmp.le.s32.totalorder %v1448, %v30
    %vm1452 = vcmp.le.s32.totalorder %v1448, %v31
    %v1453 = vsel %vm1449, 1, 0
    %v1454 = vsel %vm1450, 1, 0
    %v1455 = vsel %vm1451, 1, 0
    %v1456 = vsel %vm1452, 1, 0
    %v1457 = vadd.s32 %v1442, %v1453
    %v1458 = vadd.s32 %v1443, %v1454
    %v1459 = vadd.s32 %v1444, %v1455
    %v1460 = vadd.s32 %v1445, %v1456
    %1461 = vset.pattern.permute.xlu0 0
    %1462 = vperm.xlu0 %1461, %v729
    %v1463 = vpop.permute.xlu0 %1462
    %vm1464 = vcmp.le.s32.totalorder %v1463, %v28
    %vm1465 = vcmp.le.s32.totalorder %v1463, %v29
    %vm1466 = vcmp.le.s32.totalorder %v1463, %v30
    %vm1467 = vcmp.le.s32.totalorder %v1463, %v31
    %v1468 = vsel %vm1464, 1, 0
    %v1469 = vsel %vm1465, 1, 0
    %v1470 = vsel %vm1466, 1, 0
    %v1471 = vsel %vm1467, 1, 0
    %v1472 = vadd.s32 %v1457, %v1468
    %v1473 = vadd.s32 %v1458, %v1469
    %v1474 = vadd.s32 %v1459, %v1470
    %v1475 = vadd.s32 %v1460, %v1471
    %1476 = vset.pattern.permute.xlu0 0
    %1477 = vperm.xlu0 %1476, %v730
    %v1478 = vpop.permute.xlu0 %1477
    %vm1479 = vcmp.le.s32.totalorder %v1478, %v28
    %vm1480 = vcmp.le.s32.totalorder %v1478, %v29
    %vm1481 = vcmp.le.s32.totalorder %v1478, %v30
    %vm1482 = vcmp.le.s32.totalorder %v1478, %v31
    %v1483 = vsel %vm1479, 1, 0
    %v1484 = vsel %vm1480, 1, 0
    %v1485 = vsel %vm1481, 1, 0
    %v1486 = vsel %vm1482, 1, 0
    %v1487 = vadd.s32 %v1472, %v1483
    %v1488 = vadd.s32 %v1473, %v1484
    %v1489 = vadd.s32 %v1474, %v1485
    %v1490 = vadd.s32 %v1475, %v1486
    %1491 = vset.pattern.permute.xlu0 0
    %1492 = vperm.xlu0 %1491, %v731
    %v1493 = vpop.permute.xlu0 %1492
    %vm1494 = vcmp.le.s32.totalorder %v1493, %v28
    %vm1495 = vcmp.le.s32.totalorder %v1493, %v29
    %vm1496 = vcmp.le.s32.totalorder %v1493, %v30
    %vm1497 = vcmp.le.s32.totalorder %v1493, %v31
    %v1498 = vsel %vm1494, 1, 0
    %v1499 = vsel %vm1495, 1, 0
    %v1500 = vsel %vm1496, 1, 0
    %v1501 = vsel %vm1497, 1, 0
    %v1502 = vadd.s32 %v1487, %v1498
    %v1503 = vadd.s32 %v1488, %v1499
    %v1504 = vadd.s32 %v1489, %v1500
    %v1505 = vadd.s32 %v1490, %v1501
    %1506 = vset.pattern.permute.xlu0 0
    %1507 = vperm.xlu0 %1506, %v732
    %v1508 = vpop.permute.xlu0 %1507
    %vm1509 = vcmp.le.s32.totalorder %v1508, %v28
    %vm1510 = vcmp.le.s32.totalorder %v1508, %v29
    %vm1511 = vcmp.le.s32.totalorder %v1508, %v30
    %vm1512 = vcmp.le.s32.totalorder %v1508, %v31
    %v1513 = vsel %vm1509, 1, 0
    %v1514 = vsel %vm1510, 1, 0
    %v1515 = vsel %vm1511, 1, 0
    %v1516 = vsel %vm1512, 1, 0
    %v1517 = vadd.s32 %v1502, %v1513
    %v1518 = vadd.s32 %v1503, %v1514
    %v1519 = vadd.s32 %v1504, %v1515
    %v1520 = vadd.s32 %v1505, %v1516
    %1521 = vset.pattern.permute.xlu0 0
    %1522 = vperm.xlu0 %1521, %v733
    %v1523 = vpop.permute.xlu0 %1522
    %vm1524 = vcmp.le.s32.totalorder %v1523, %v28
    %vm1525 = vcmp.le.s32.totalorder %v1523, %v29
    %vm1526 = vcmp.le.s32.totalorder %v1523, %v30
    %vm1527 = vcmp.le.s32.totalorder %v1523, %v31
    %v1528 = vsel %vm1524, 1, 0
    %v1529 = vsel %vm1525, 1, 0
    %v1530 = vsel %vm1526, 1, 0
    %v1531 = vsel %vm1527, 1, 0
    %v1532 = vadd.s32 %v1517, %v1528
    %v1533 = vadd.s32 %v1518, %v1529
    %v1534 = vadd.s32 %v1519, %v1530
    %v1535 = vadd.s32 %v1520, %v1531
    %1536 = vset.pattern.permute.xlu0 0
    %1537 = vperm.xlu0 %1536, %v734
    %v1538 = vpop.permute.xlu0 %1537
    %vm1539 = vcmp.le.s32.totalorder %v1538, %v28
    %vm1540 = vcmp.le.s32.totalorder %v1538, %v29
    %vm1541 = vcmp.le.s32.totalorder %v1538, %v30
    %vm1542 = vcmp.le.s32.totalorder %v1538, %v31
    %v1543 = vsel %vm1539, 1, 0
    %v1544 = vsel %vm1540, 1, 0
    %v1545 = vsel %vm1541, 1, 0
    %v1546 = vsel %vm1542, 1, 0
    %v1547 = vadd.s32 %v1532, %v1543
    %v1548 = vadd.s32 %v1533, %v1544
    %v1549 = vadd.s32 %v1534, %v1545
    %v1550 = vadd.s32 %v1535, %v1546
    %1551 = vset.pattern.permute.xlu0 0
    %1552 = vperm.xlu0 %1551, %v735
    %v1553 = vpop.permute.xlu0 %1552
    %vm1554 = vcmp.le.s32.totalorder %v1553, %v28
    %vm1555 = vcmp.le.s32.totalorder %v1553, %v29
    %vm1556 = vcmp.le.s32.totalorder %v1553, %v30
    %vm1557 = vcmp.le.s32.totalorder %v1553, %v31
    %v1558 = vsel %vm1554, 1, 0
    %v1559 = vsel %vm1555, 1, 0
    %v1560 = vsel %vm1556, 1, 0
    %v1561 = vsel %vm1557, 1, 0
    %v1562 = vadd.s32 %v1547, %v1558
    %v1563 = vadd.s32 %v1548, %v1559
    %v1564 = vadd.s32 %v1549, %v1560
    %v1565 = vadd.s32 %v1550, %v1561
    %1566 = vset.pattern.permute.xlu0 0
    %1567 = vperm.xlu0 %1566, %v736
    %v1568 = vpop.permute.xlu0 %1567
    %vm1569 = vcmp.le.s32.totalorder %v1568, %v28
    %vm1570 = vcmp.le.s32.totalorder %v1568, %v29
    %vm1571 = vcmp.le.s32.totalorder %v1568, %v30
    %vm1572 = vcmp.le.s32.totalorder %v1568, %v31
    %v1573 = vsel %vm1569, 1, 0
    %v1574 = vsel %vm1570, 1, 0
    %v1575 = vsel %vm1571, 1, 0
    %v1576 = vsel %vm1572, 1, 0
    %v1577 = vadd.s32 %v1562, %v1573
    %v1578 = vadd.s32 %v1563, %v1574
    %v1579 = vadd.s32 %v1564, %v1575
    %v1580 = vadd.s32 %v1565, %v1576
    %1581 = vset.pattern.permute.xlu0 0
    %1582 = vperm.xlu0 %1581, %v737
    %v1583 = vpop.permute.xlu0 %1582
    %vm1584 = vcmp.le.s32.totalorder %v1583, %v28
    %vm1585 = vcmp.le.s32.totalorder %v1583, %v29
    %vm1586 = vcmp.le.s32.totalorder %v1583, %v30
    %vm1587 = vcmp.le.s32.totalorder %v1583, %v31
    %v1588 = vsel %vm1584, 1, 0
    %v1589 = vsel %vm1585, 1, 0
    %v1590 = vsel %vm1586, 1, 0
    %v1591 = vsel %vm1587, 1, 0
    %v1592 = vadd.s32 %v1577, %v1588
    %v1593 = vadd.s32 %v1578, %v1589
    %v1594 = vadd.s32 %v1579, %v1590
    %v1595 = vadd.s32 %v1580, %v1591
    %1596 = vset.pattern.permute.xlu0 0
    %1597 = vperm.xlu0 %1596, %v738
    %v1598 = vpop.permute.xlu0 %1597
    %vm1599 = vcmp.le.s32.totalorder %v1598, %v28
    %vm1600 = vcmp.le.s32.totalorder %v1598, %v29
    %vm1601 = vcmp.le.s32.totalorder %v1598, %v30
    %vm1602 = vcmp.le.s32.totalorder %v1598, %v31
    %v1603 = vsel %vm1599, 1, 0
    %v1604 = vsel %vm1600, 1, 0
    %v1605 = vsel %vm1601, 1, 0
    %v1606 = vsel %vm1602, 1, 0
    %v1607 = vadd.s32 %v1592, %v1603
    %v1608 = vadd.s32 %v1593, %v1604
    %v1609 = vadd.s32 %v1594, %v1605
    %v1610 = vadd.s32 %v1595, %v1606
    %1611 = vset.pattern.permute.xlu0 0
    %1612 = vperm.xlu0 %1611, %v739
    %v1613 = vpop.permute.xlu0 %1612
    %vm1614 = vcmp.le.s32.totalorder %v1613, %v28
    %vm1615 = vcmp.le.s32.totalorder %v1613, %v29
    %vm1616 = vcmp.le.s32.totalorder %v1613, %v30
    %vm1617 = vcmp.le.s32.totalorder %v1613, %v31
    %v1618 = vsel %vm1614, 1, 0
    %v1619 = vsel %vm1615, 1, 0
    %v1620 = vsel %vm1616, 1, 0
    %v1621 = vsel %vm1617, 1, 0
    %v1622 = vadd.s32 %v1607, %v1618
    %v1623 = vadd.s32 %v1608, %v1619
    %v1624 = vadd.s32 %v1609, %v1620
    %v1625 = vadd.s32 %v1610, %v1621
    %1626 = vset.pattern.permute.xlu0 0
    %1627 = vperm.xlu0 %1626, %v740
    %v1628 = vpop.permute.xlu0 %1627
    %vm1629 = vcmp.le.s32.totalorder %v1628, %v28
    %vm1630 = vcmp.le.s32.totalorder %v1628, %v29
    %vm1631 = vcmp.le.s32.totalorder %v1628, %v30
    %vm1632 = vcmp.le.s32.totalorder %v1628, %v31
    %v1633 = vsel %vm1629, 1, 0
    %v1634 = vsel %vm1630, 1, 0
    %v1635 = vsel %vm1631, 1, 0
    %v1636 = vsel %vm1632, 1, 0
    %v1637 = vadd.s32 %v1622, %v1633
    %v1638 = vadd.s32 %v1623, %v1634
    %v1639 = vadd.s32 %v1624, %v1635
    %v1640 = vadd.s32 %v1625, %v1636
    %1641 = vset.pattern.permute.xlu0 0
    %1642 = vperm.xlu0 %1641, %v741
    %v1643 = vpop.permute.xlu0 %1642
    %vm1644 = vcmp.le.s32.totalorder %v1643, %v28
    %vm1645 = vcmp.le.s32.totalorder %v1643, %v29
    %vm1646 = vcmp.le.s32.totalorder %v1643, %v30
    %vm1647 = vcmp.le.s32.totalorder %v1643, %v31
    %v1648 = vsel %vm1644, 1, 0
    %v1649 = vsel %vm1645, 1, 0
    %v1650 = vsel %vm1646, 1, 0
    %v1651 = vsel %vm1647, 1, 0
    %v1652 = vadd.s32 %v1637, %v1648
    %v1653 = vadd.s32 %v1638, %v1649
    %v1654 = vadd.s32 %v1639, %v1650
    %v1655 = vadd.s32 %v1640, %v1651
    %1656 = vset.pattern.permute.xlu0 0
    %1657 = vperm.xlu0 %1656, %v742
    %v1658 = vpop.permute.xlu0 %1657
    %vm1659 = vcmp.le.s32.totalorder %v1658, %v28
    %vm1660 = vcmp.le.s32.totalorder %v1658, %v29
    %vm1661 = vcmp.le.s32.totalorder %v1658, %v30
    %vm1662 = vcmp.le.s32.totalorder %v1658, %v31
    %v1663 = vsel %vm1659, 1, 0
    %v1664 = vsel %vm1660, 1, 0
    %v1665 = vsel %vm1661, 1, 0
    %v1666 = vsel %vm1662, 1, 0
    %v1667 = vadd.s32 %v1652, %v1663
    %v1668 = vadd.s32 %v1653, %v1664
    %v1669 = vadd.s32 %v1654, %v1665
    %v1670 = vadd.s32 %v1655, %v1666
    %1671 = vset.pattern.permute.xlu0 0
    %1672 = vperm.xlu0 %1671, %v743
    %v1673 = vpop.permute.xlu0 %1672
    %vm1674 = vcmp.le.s32.totalorder %v1673, %v28
    %vm1675 = vcmp.le.s32.totalorder %v1673, %v29
    %vm1676 = vcmp.le.s32.totalorder %v1673, %v30
    %vm1677 = vcmp.le.s32.totalorder %v1673, %v31
    %v1678 = vsel %vm1674, 1, 0
    %v1679 = vsel %vm1675, 1, 0
    %v1680 = vsel %vm1676, 1, 0
    %v1681 = vsel %vm1677, 1, 0
    %v1682 = vadd.s32 %v1667, %v1678
    %v1683 = vadd.s32 %v1668, %v1679
    %v1684 = vadd.s32 %v1669, %v1680
    %v1685 = vadd.s32 %v1670, %v1681
    %1686 = vset.pattern.permute.xlu0 0
    %1687 = vperm.xlu0 %1686, %v744
    %v1688 = vpop.permute.xlu0 %1687
    %vm1689 = vcmp.le.s32.totalorder %v1688, %v28
    %vm1690 = vcmp.le.s32.totalorder %v1688, %v29
    %vm1691 = vcmp.le.s32.totalorder %v1688, %v30
    %vm1692 = vcmp.le.s32.totalorder %v1688, %v31
    %v1693 = vsel %vm1689, 1, 0
    %v1694 = vsel %vm1690, 1, 0
    %v1695 = vsel %vm1691, 1, 0
    %v1696 = vsel %vm1692, 1, 0
    %v1697 = vadd.s32 %v1682, %v1693
    %v1698 = vadd.s32 %v1683, %v1694
    %v1699 = vadd.s32 %v1684, %v1695
    %v1700 = vadd.s32 %v1685, %v1696
    %v1701 = vrot.slane %v1697, 4
    %v1702 = vadd.s32 %v1697, %v1701
    %v1703 = vrot.slane %v1702, 2
    %v1704 = vadd.s32 %v1702, %v1703
    %v1705 = vrot.slane %v1704, 1
    %v1706 = vadd.s32 %v1704, %v1705
    %v1707 = vrot.slane %v1698, 4
    %v1708 = vadd.s32 %v1698, %v1707
    %v1709 = vrot.slane %v1708, 2
    %v1710 = vadd.s32 %v1708, %v1709
    %v1711 = vrot.slane %v1710, 1
    %v1712 = vadd.s32 %v1710, %v1711
    %v1713 = vrot.slane %v1699, 4
    %v1714 = vadd.s32 %v1699, %v1713
    %v1715 = vrot.slane %v1714, 2
    %v1716 = vadd.s32 %v1714, %v1715
    %v1717 = vrot.slane %v1716, 1
    %v1718 = vadd.s32 %v1716, %v1717
    %v1719 = vrot.slane %v1700, 4
    %v1720 = vadd.s32 %v1700, %v1719
    %v1721 = vrot.slane %v1720, 2
    %v1722 = vadd.s32 %v1720, %v1721
    %v1723 = vrot.slane %v1722, 1
    %v1724 = vadd.s32 %v1722, %v1723
    %v1725 = vstv %s614
    %vm1726 = vcmp.lt.s32.totalorder %v28, %v1725
    %vm1727 = vcmp.lt.s32.totalorder %v29, %v1725
    %vm1728 = vcmp.lt.s32.totalorder %v30, %v1725
    %vm1729 = vcmp.lt.s32.totalorder %v31, %v1725
    %v1730 = vsel %vm1726, %v1706, 4294967295
    %v1731 = vsel %vm1727, %v1712, 4294967295
    %v1732 = vsel %vm1728, %v1718, 4294967295
    %v1733 = vsel %vm1729, %v1724, 4294967295
    %v1734 = vcombine.low %v1730, %v1731
    %v1735 = vcombine.low %v1732, %v1733
    %v1737 = vunpack.c.l.s4 1966171168
    %v1738 = vunpack.c.0.s8 %v1737
    %v1739 = vlaneseq
    %v1740 = vshrl.u32 %v1739, 7
    %v1741 = vsub.s32 %v1738, %v1740
    %v1742 = vrot.slane %v1734, %v1741
    %v1744 = vunpack.c.l.s4 1966171168
    %v1745 = vunpack.c.0.s8 %v1744
    %v1746 = vlaneseq
    %v1747 = vshrl.u32 %v1746, 7
    %v1748 = vsub.s32 %v1745, %v1747
    %v1749 = vrot.slane %v1735, %v1748
    %v1750 = vcombine.low %v1742, %v1749
    %v1752 = vunpack.c.l.s4 1966171168
    %v1753 = vunpack.c.0.s8 %v1752
    %v1754 = vlaneseq
    %v1755 = vshrl.u32 %v1754, 7
    %v1756 = vsub.s32 %v1753, %v1755
    %v1757 = vrot.slane %v1750, %v1756
    %v1758 = vlaneseq
    %vm1759 = vcmp.ge.s32.totalorder %v1758, 0
    %vm1760 = vcmp.lt.s32.totalorder %v1758, 512
    %vm1761 = vmand %vm1759, %vm1760
    %1762 = vst.msk [vmem:[#allocation6] sm:$0xf] %vm1761, %v1757
    // Predicated region
    $region10: #{tpu_custom_call.1} parent=1 // pred_check
      _
    $region11: #{tpu_custom_call.1} parent=1 // pred_check_branch
      %1764 = sbr.rel (0) target = $region13
    $region12: #{tpu_custom_call.1} parent=1 // pred_region
      %s1766 = ssub.s32 64, 64
      %1767 = vsyncadd [#allocation4], %s1766
      %s1769 = sshll.u32 [#allocation6], 4
      %s1770 = int_to_ptr.vmem [resolvable:$true] %s1769
      %1772 = dma.vmem_to_hbm [thread:$0]  %s1770, 64, %s1, [#allocation4]
    $region13: #{tpu_custom_call.1} parent=1 // pred_fallthru
      _
    // Predicated region
    $region14: #{tpu_custom_call.1} parent=1 // pred_check
      _
    $region15: #{tpu_custom_call.1} parent=1 // pred_check_branch
      %1774 = sbr.rel (0) target = $region17
    $region16: #{tpu_custom_call.1} parent=1 // pred_region
      %s1776 = ssub.s32 16, 16
      %1777 = vsyncadd [#allocation5], %s1776
      %1780 = dma.smem_to_hbm [#allocation7], 16, %s2, [#allocation5]
    $region17: #{tpu_custom_call.1} parent=1 // pred_fallthru
      _
    // Predicated region
    $region18: #{tpu_custom_call.1} parent=1 // pred_check
      _
    $region19: #{tpu_custom_call.1} parent=1 // pred_check_branch
      %1782 = sbr.rel (0) target = $region21
    $region20: #{tpu_custom_call.1} parent=1 // pred_region
      %1783 = dma.done [#allocation4], 64
    $region21: #{tpu_custom_call.1} parent=1 // pred_fallthru
      _
    // Predicated region
    $region22: #{tpu_custom_call.1} parent=1 // pred_check
      _
    $region23: #{tpu_custom_call.1} parent=1 // pred_check_branch
      %1785 = sbr.rel (0) target = $region25
    $region24: #{tpu_custom_call.1} parent=1 // pred_region
      %1786 = dma.done [#allocation5], 16
    $region25: #{tpu_custom_call.1} parent=1 // pred_fallthru
      _
    %1787 = sfence
    %1788 = vsyncpa [#allocation3], 1
    %1789 = vsyncpa [#allocation4], 1
    %1790 = vsyncpa [#allocation5], 1

</llo_original>
